<compile_context>
chip_gen: v6e
topology: v6e:2x2x1
jax: 0.10.0
libtpu: 0.0.40
codegen_flags: <defaults>
</compile_context>

<pallas_src>
import math

import jax
import jax.numpy as jnp
from jax import lax
from jax.experimental import pallas as pl
from jax.experimental.pallas import tpu as pltpu


# ----------------------------- fused kernel --------------------------------


def _net_kernel(p1_ref, w1_ref, w2_ref, fcw_ref, b_ref, o_ref):
    """Whole Net forward in one kernel; every intermediate stays on-chip.

    p1_ref : (4*B*64, 49)  conv1 im2col patches, rows ordered (pool_pos, b, ph, pw)
    w1_ref : (49, 16)      conv1 weight, rows (kh, kw)
    w2_ref : (784, 32)     conv2 weight, rows (kh, kw, ic)
    fcw_ref: (240, 128)    packed fc weights: [0:32,0:120]=fc1, [32:152,0:84]=fc2,
                           [152:236,0:10]=fc3 (zero padded elsewhere)
    b_ref  : (8, 128)      packed biases: row0 conv1(16), row1 conv2(32),
                           row2 fc1(120), row3 fc2(84), row4 fc3(10)
    o_ref  : (B, 10)
    """
    n4, _ = p1_ref.shape
    s = n4 // 4            # B * 64 pooled conv1 pixels
    b = s // 64            # batch

    # --- conv1: one im2col matmul for all 4 pool-window positions -----------
    y1 = jnp.dot(p1_ref[...], w1_ref[...], preferred_element_type=jnp.float32)
    y1 = jnp.maximum(jnp.maximum(y1[0:s], y1[s:2 * s]),
                     jnp.maximum(y1[2 * s:3 * s], y1[3 * s:4 * s]))
    h1 = jnp.maximum(y1 + b_ref[0:1, 0:16], 0.0)        # (B*64, 16) pooled+relu
    h1 = h1.reshape(b, 8, 8, 16)                        # pooled NHWC map, VMEM resident

    # --- conv2: im2col assembled in-kernel, one matmul, fused 2x2 max-pool --
    # feature order (kh, kw, ic) matches the pre-transposed w2 slab.
    taps = [h1[:, kh:kh + 2, kw:kw + 2, :]
            for kh in range(7) for kw in range(7)]      # 49 x (B, 2, 2, 16)
    cols = jnp.concatenate(taps, axis=-1)               # (B, 2, 2, 784)
    lhs = jnp.concatenate(
        [cols[:, oh, ow, :] for oh in range(2) for ow in range(2)],
        axis=0)                                         # (4*B, 784), rows (pos, b)
    y2 = jnp.dot(lhs, w2_ref[...], preferred_element_type=jnp.float32)   # (4*B, 32)
    y2 = jnp.maximum(jnp.maximum(y2[0:b], y2[b:2 * b]),
                     jnp.maximum(y2[2 * b:3 * b], y2[3 * b:4 * b]))
    h2 = jnp.maximum(y2 + b_ref[1:2, 0:32], 0.0)        # (B, 32) == flattened features

    # --- fc1 / fc2 / fc3 from the packed weight slab -------------------------
    h = jnp.dot(h2, fcw_ref[0:32, 0:120], preferred_element_type=jnp.float32)
    h = jnp.maximum(h + b_ref[2:3, 0:120], 0.0)
    h = jnp.dot(h, fcw_ref[32:152, 0:84], preferred_element_type=jnp.float32)
    h = jnp.maximum(h + b_ref[3:4, 0:84], 0.0)
    o_ref[...] = (jnp.dot(h, fcw_ref[152:236, 0:10],
                          preferred_element_type=jnp.float32)
                  + b_ref[4:5, 0:10])


# ----------------------------- wrappers -------------------------------------


def pack_params(params):
    """One-time parameter repacking (pure layout, no compute)."""
    w1m = params["conv1_w"].reshape(16, 49).T                        # (49, 16)
    w2m = params["conv2_w"].transpose(2, 3, 1, 0).reshape(784, 32)   # (784, 32), rows (kh,kw,ic)

    fcw = jnp.zeros((240, 128), jnp.float32)
    fcw = fcw.at[0:32, 0:120].set(params["fc1_w"].T)
    fcw = fcw.at[32:152, 0:84].set(params["fc2_w"].T)
    fcw = fcw.at[152:236, 0:10].set(params["fc3_w"].T)

    bias = jnp.zeros((8, 128), jnp.float32)
    bias = bias.at[0, 0:16].set(params["conv1_b"])
    bias = bias.at[1, 0:32].set(params["conv2_b"])
    bias = bias.at[2, 0:120].set(params["fc1_b"])
    bias = bias.at[3, 0:84].set(params["fc2_b"])
    bias = bias.at[4, 0:10].set(params["fc3_b"])
    return {"w1m": w1m, "w2m": w2m, "fcw": fcw, "bias": bias}


def net_forward(x, packed):
    """x: (B, 1, 22, 22) NCHW (22x22 is the spatial size the module implies)."""
    B = x.shape[0]

    # conv1 im2col: one XLA patches op + 2 transposes/reshapes (instead of
    # ~50 slice/stack ops).  Rows ordered (pool_pos, b, ph, pw) so the kernel
    # fuses the 2x2 max-pool as a max over 4 contiguous row blocks.
    pt = lax.conv_general_dilated_patches(
        x, filter_shape=(7, 7), window_strides=(1, 1), padding="VALID",
        dimension_numbers=("NCHW", "OIHW", "NCHW"),
        precision=lax.Precision.HIGHEST)                # (B, 49, 16, 16)
    pt = jnp.transpose(pt, (0, 2, 3, 1))                # (B, oh, ow, 49)
    pt = pt.reshape(B, 8, 2, 8, 2, 49)                  # (B, ph, v, pw, u, 49)
    pt = jnp.transpose(pt, (2, 4, 0, 1, 3, 5))          # (v, u, B, ph, pw, 49)
    p1 = pt.reshape(4 * B * 64, 49)

    vmem = pl.BlockSpec(memory_space=pltpu.MemorySpace.VMEM)
    return pl.pallas_call(
        _net_kernel,
        out_shape=jax.ShapeDtypeStruct((B, 10), jnp.float32),
        in_specs=[vmem] * 5,
        out_specs=vmem,
    )(p1, packed["w1m"], packed["w2m"], packed["fcw"], packed["bias"])


# ------------------------ params & reference --------------------------------


def init_params(key):
    def u(k, shape, fan_in):
        bound = 1.0 / math.sqrt(fan_in)
        return jax.random.uniform(k, shape, jnp.float32, -bound, bound)

    ks = jax.random.split(key, 10)
    return {
        "conv1_w": u(ks[0], (16, 1, 7, 7), 1 * 7 * 7),
        "conv1_b": u(ks[1], (16,), 1 * 7 * 7),
        "conv2_w": u(ks[2], (32, 16, 7, 7), 16 * 7 * 7),
        "conv2_b": u(ks[3], (32,), 16 * 7 * 7),
        "fc1_w": u(ks[4], (120, 32), 32),
        "fc1_b": u(ks[5], (120,), 32),
        "fc2_w": u(ks[6], (84, 120), 120),
        "fc2_b": u(ks[7], (84,), 120),
        "fc3_w": u(ks[8], (10, 84), 84),
        "fc3_b": u(ks[9], (10,), 84),
    }


def ref_forward(x, p):
    dn = ("NCHW", "OIHW", "NCHW")
    prec = lax.Precision.HIGHEST
    y = lax.conv_general_dilated(x, p["conv1_w"], (1, 1), "VALID",
                                 dimension_numbers=dn, precision=prec)
    y = jnp.maximum(y + p["conv1_b"][None, :, None, None], 0.0)
    y = lax.reduce_window(y, -jnp.inf, lax.max, (1, 1, 2, 2), (1, 1, 2, 2), "VALID")
    y = lax.conv_general_dilated(y, p["conv2_w"], (1, 1), "VALID",
                                 dimension_numbers=dn, precision=prec)
    y = jnp.maximum(y + p["conv2_b"][None, :, None, None], 0.0)
    y = lax.reduce_window(y, -jnp.inf, lax.max, (1, 1, 2, 2), (1, 1, 2, 2), "VALID")
    y = y.reshape(y.shape[0], -1)
    y = jnp.maximum(jnp.dot(y, p["fc1_w"].T, precision=prec) + p["fc1_b"], 0.0)
    y = jnp.maximum(jnp.dot(y, p["fc2_w"].T, precision=prec) + p["fc2_b"], 0.0)
    return jnp.dot(y, p["fc3_w"].T, precision=prec) + p["fc3_b"]


# ------------------------------- main ---------------------------------------


if __name__ == "__main__":
    key = jax.random.PRNGKey(0)
    pkey, xkey = jax.random.split(key)
    params = init_params(pkey)

    # Geometry implied by the module: 22x22 single-channel input, batch=2.
    x = jax.random.normal(xkey, (2, 1, 22, 22), jnp.float32)

    packed = pack_params(params)
    out = jax.jit(net_forward)(x, packed)
    out = jax.block_until_ready(out)

    ref = ref_forward(x, params)
    err = float(jnp.max(jnp.abs(out - ref)))
    if out.shape != (2, 10) or not bool(jnp.allclose(out, ref, atol=5e-3, rtol=5e-3)):
        raise SystemExit(f"mismatch: max abs err {err}")
    print("KERNEL_OK")
</pallas_src>

<mosaic_0001>
module attributes {stable_mosaic.version = 11 : i64} {
  func.func @_net_kernel(%arg0: memref<512x49xf32, #tpu.memory_space<vmem>>, %arg1: memref<49x16xf32, #tpu.memory_space<vmem>>, %arg2: memref<784x32xf32, #tpu.memory_space<vmem>>, %arg3: memref<240x128xf32, #tpu.memory_space<vmem>>, %arg4: memref<8x128xf32, #tpu.memory_space<vmem>>, %arg5: memref<2x10xf32, #tpu.memory_space<vmem>>) attributes {dimension_semantics = [], scalar_prefetch = 0 : i64, scratch_operands = 0 : i64, tpu.core_type = #tpu.core_type<tc>} {
    %c0 = arith.constant 0 : index
    %c0_0 = arith.constant 0 : index
    %0 = vector.load %arg0[%c0, %c0_0] : memref<512x49xf32, #tpu.memory_space<vmem>>, vector<512x49xf32>
    %c0_1 = arith.constant 0 : index
    %c0_2 = arith.constant 0 : index
    %1 = vector.load %arg1[%c0_1, %c0_2] : memref<49x16xf32, #tpu.memory_space<vmem>>, vector<49x16xf32>
    %cst = arith.constant dense<0.000000e+00> : vector<512x16xf32>
    %2 = tpu.matmul %0, %1, %cst {dimension_numbers = #tpu.dot_dimension_numbers<[1], [0], [0], [1], [0, 0, 1, 1], [], []>} : vector<512x49xf32>, vector<49x16xf32>, vector<512x16xf32> -> vector<512x16xf32>
    %3 = vector.extract_strided_slice %2 {offsets = [0, 0], sizes = [128, 16], strides = [1, 1]} : vector<512x16xf32> to vector<128x16xf32>
    %4 = vector.extract_strided_slice %2 {offsets = [128, 0], sizes = [128, 16], strides = [1, 1]} : vector<512x16xf32> to vector<128x16xf32>
    %5 = arith.maximumf %3, %4 : vector<128x16xf32>
    %6 = vector.extract_strided_slice %2 {offsets = [256, 0], sizes = [128, 16], strides = [1, 1]} : vector<512x16xf32> to vector<128x16xf32>
    %7 = vector.extract_strided_slice %2 {offsets = [384, 0], sizes = [128, 16], strides = [1, 1]} : vector<512x16xf32> to vector<128x16xf32>
    %8 = arith.maximumf %6, %7 : vector<128x16xf32>
    %9 = arith.maximumf %5, %8 : vector<128x16xf32>
    %c0_3 = arith.constant 0 : index
    %c0_4 = arith.constant 0 : index
    %10 = vector.load %arg4[%c0_3, %c0_4] : memref<8x128xf32, #tpu.memory_space<vmem>>, vector<1x16xf32>
    %11 = vector.broadcast %10 : vector<1x16xf32> to vector<128x16xf32>
    %12 = arith.addf %9, %11 : vector<128x16xf32>
    %cst_5 = arith.constant 0.000000e+00 : f32
    %13 = vector.broadcast %cst_5 : f32 to vector<128x16xf32>
    %14 = arith.maximumf %12, %13 : vector<128x16xf32>
    %15 = vector.shape_cast %14 : vector<128x16xf32> to vector<2x8x8x16xf32>
    %16 = vector.extract_strided_slice %15 {offsets = [0, 0, 0, 0], sizes = [2, 2, 2, 16], strides = [1, 1, 1, 1]} : vector<2x8x8x16xf32> to vector<2x2x2x16xf32>
    %17 = vector.extract_strided_slice %15 {offsets = [0, 0, 1, 0], sizes = [2, 2, 2, 16], strides = [1, 1, 1, 1]} : vector<2x8x8x16xf32> to vector<2x2x2x16xf32>
    %18 = vector.extract_strided_slice %15 {offsets = [0, 0, 2, 0], sizes = [2, 2, 2, 16], strides = [1, 1, 1, 1]} : vector<2x8x8x16xf32> to vector<2x2x2x16xf32>
    %19 = vector.extract_strided_slice %15 {offsets = [0, 0, 3, 0], sizes = [2, 2, 2, 16], strides = [1, 1, 1, 1]} : vector<2x8x8x16xf32> to vector<2x2x2x16xf32>
    %20 = vector.extract_strided_slice %15 {offsets = [0, 0, 4, 0], sizes = [2, 2, 2, 16], strides = [1, 1, 1, 1]} : vector<2x8x8x16xf32> to vector<2x2x2x16xf32>
    %21 = vector.extract_strided_slice %15 {offsets = [0, 0, 5, 0], sizes = [2, 2, 2, 16], strides = [1, 1, 1, 1]} : vector<2x8x8x16xf32> to vector<2x2x2x16xf32>
    %22 = vector.extract_strided_slice %15 {offsets = [0, 0, 6, 0], sizes = [2, 2, 2, 16], strides = [1, 1, 1, 1]} : vector<2x8x8x16xf32> to vector<2x2x2x16xf32>
    %23 = vector.extract_strided_slice %15 {offsets = [0, 1, 0, 0], sizes = [2, 2, 2, 16], strides = [1, 1, 1, 1]} : vector<2x8x8x16xf32> to vector<2x2x2x16xf32>
    %24 = vector.extract_strided_slice %15 {offsets = [0, 1, 1, 0], sizes = [2, 2, 2, 16], strides = [1, 1, 1, 1]} : vector<2x8x8x16xf32> to vector<2x2x2x16xf32>
    %25 = vector.extract_strided_slice %15 {offsets = [0, 1, 2, 0], sizes = [2, 2, 2, 16], strides = [1, 1, 1, 1]} : vector<2x8x8x16xf32> to vector<2x2x2x16xf32>
    %26 = vector.extract_strided_slice %15 {offsets = [0, 1, 3, 0], sizes = [2, 2, 2, 16], strides = [1, 1, 1, 1]} : vector<2x8x8x16xf32> to vector<2x2x2x16xf32>
    %27 = vector.extract_strided_slice %15 {offsets = [0, 1, 4, 0], sizes = [2, 2, 2, 16], strides = [1, 1, 1, 1]} : vector<2x8x8x16xf32> to vector<2x2x2x16xf32>
    %28 = vector.extract_strided_slice %15 {offsets = [0, 1, 5, 0], sizes = [2, 2, 2, 16], strides = [1, 1, 1, 1]} : vector<2x8x8x16xf32> to vector<2x2x2x16xf32>
    %29 = vector.extract_strided_slice %15 {offsets = [0, 1, 6, 0], sizes = [2, 2, 2, 16], strides = [1, 1, 1, 1]} : vector<2x8x8x16xf32> to vector<2x2x2x16xf32>
    %30 = vector.extract_strided_slice %15 {offsets = [0, 2, 0, 0], sizes = [2, 2, 2, 16], strides = [1, 1, 1, 1]} : vector<2x8x8x16xf32> to vector<2x2x2x16xf32>
    %31 = vector.extract_strided_slice %15 {offsets = [0, 2, 1, 0], sizes = [2, 2, 2, 16], strides = [1, 1, 1, 1]} : vector<2x8x8x16xf32> to vector<2x2x2x16xf32>
    %32 = vector.extract_strided_slice %15 {offsets = [0, 2, 2, 0], sizes = [2, 2, 2, 16], strides = [1, 1, 1, 1]} : vector<2x8x8x16xf32> to vector<2x2x2x16xf32>
    %33 = vector.extract_strided_slice %15 {offsets = [0, 2, 3, 0], sizes = [2, 2, 2, 16], strides = [1, 1, 1, 1]} : vector<2x8x8x16xf32> to vector<2x2x2x16xf32>
    %34 = vector.extract_strided_slice %15 {offsets = [0, 2, 4, 0], sizes = [2, 2, 2, 16], strides = [1, 1, 1, 1]} : vector<2x8x8x16xf32> to vector<2x2x2x16xf32>
    %35 = vector.extract_strided_slice %15 {offsets = [0, 2, 5, 0], sizes = [2, 2, 2, 16], strides = [1, 1, 1, 1]} : vector<2x8x8x16xf32> to vector<2x2x2x16xf32>
    %36 = vector.extract_strided_slice %15 {offsets = [0, 2, 6, 0], sizes = [2, 2, 2, 16], strides = [1, 1, 1, 1]} : vector<2x8x8x16xf32> to vector<2x2x2x16xf32>
    %37 = vector.extract_strided_slice %15 {offsets = [0, 3, 0, 0], sizes = [2, 2, 2, 16], strides = [1, 1, 1, 1]} : vector<2x8x8x16xf32> to vector<2x2x2x16xf32>
    %38 = vector.extract_strided_slice %15 {offsets = [0, 3, 1, 0], sizes = [2, 2, 2, 16], strides = [1, 1, 1, 1]} : vector<2x8x8x16xf32> to vector<2x2x2x16xf32>
    %39 = vector.extract_strided_slice %15 {offsets = [0, 3, 2, 0], sizes = [2, 2, 2, 16], strides = [1, 1, 1, 1]} : vector<2x8x8x16xf32> to vector<2x2x2x16xf32>
    %40 = vector.extract_strided_slice %15 {offsets = [0, 3, 3, 0], sizes = [2, 2, 2, 16], strides = [1, 1, 1, 1]} : vector<2x8x8x16xf32> to vector<2x2x2x16xf32>
    %41 = vector.extract_strided_slice %15 {offsets = [0, 3, 4, 0], sizes = [2, 2, 2, 16], strides = [1, 1, 1, 1]} : vector<2x8x8x16xf32> to vector<2x2x2x16xf32>
    %42 = vector.extract_strided_slice %15 {offsets = [0, 3, 5, 0], sizes = [2, 2, 2, 16], strides = [1, 1, 1, 1]} : vector<2x8x8x16xf32> to vector<2x2x2x16xf32>
    %43 = vector.extract_strided_slice %15 {offsets = [0, 3, 6, 0], sizes = [2, 2, 2, 16], strides = [1, 1, 1, 1]} : vector<2x8x8x16xf32> to vector<2x2x2x16xf32>
    %44 = vector.extract_strided_slice %15 {offsets = [0, 4, 0, 0], sizes = [2, 2, 2, 16], strides = [1, 1, 1, 1]} : vector<2x8x8x16xf32> to vector<2x2x2x16xf32>
    %45 = vector.extract_strided_slice %15 {offsets = [0, 4, 1, 0], sizes = [2, 2, 2, 16], strides = [1, 1, 1, 1]} : vector<2x8x8x16xf32> to vector<2x2x2x16xf32>
    %46 = vector.extract_strided_slice %15 {offsets = [0, 4, 2, 0], sizes = [2, 2, 2, 16], strides = [1, 1, 1, 1]} : vector<2x8x8x16xf32> to vector<2x2x2x16xf32>
    %47 = vector.extract_strided_slice %15 {offsets = [0, 4, 3, 0], sizes = [2, 2, 2, 16], strides = [1, 1, 1, 1]} : vector<2x8x8x16xf32> to vector<2x2x2x16xf32>
    %48 = vector.extract_strided_slice %15 {offsets = [0, 4, 4, 0], sizes = [2, 2, 2, 16], strides = [1, 1, 1, 1]} : vector<2x8x8x16xf32> to vector<2x2x2x16xf32>
    %49 = vector.extract_strided_slice %15 {offsets = [0, 4, 5, 0], sizes = [2, 2, 2, 16], strides = [1, 1, 1, 1]} : vector<2x8x8x16xf32> to vector<2x2x2x16xf32>
    %50 = vector.extract_strided_slice %15 {offsets = [0, 4, 6, 0], sizes = [2, 2, 2, 16], strides = [1, 1, 1, 1]} : vector<2x8x8x16xf32> to vector<2x2x2x16xf32>
    %51 = vector.extract_strided_slice %15 {offsets = [0, 5, 0, 0], sizes = [2, 2, 2, 16], strides = [1, 1, 1, 1]} : vector<2x8x8x16xf32> to vector<2x2x2x16xf32>
    %52 = vector.extract_strided_slice %15 {offsets = [0, 5, 1, 0], sizes = [2, 2, 2, 16], strides = [1, 1, 1, 1]} : vector<2x8x8x16xf32> to vector<2x2x2x16xf32>
    %53 = vector.extract_strided_slice %15 {offsets = [0, 5, 2, 0], sizes = [2, 2, 2, 16], strides = [1, 1, 1, 1]} : vector<2x8x8x16xf32> to vector<2x2x2x16xf32>
    %54 = vector.extract_strided_slice %15 {offsets = [0, 5, 3, 0], sizes = [2, 2, 2, 16], strides = [1, 1, 1, 1]} : vector<2x8x8x16xf32> to vector<2x2x2x16xf32>
    %55 = vector.extract_strided_slice %15 {offsets = [0, 5, 4, 0], sizes = [2, 2, 2, 16], strides = [1, 1, 1, 1]} : vector<2x8x8x16xf32> to vector<2x2x2x16xf32>
    %56 = vector.extract_strided_slice %15 {offsets = [0, 5, 5, 0], sizes = [2, 2, 2, 16], strides = [1, 1, 1, 1]} : vector<2x8x8x16xf32> to vector<2x2x2x16xf32>
    %57 = vector.extract_strided_slice %15 {offsets = [0, 5, 6, 0], sizes = [2, 2, 2, 16], strides = [1, 1, 1, 1]} : vector<2x8x8x16xf32> to vector<2x2x2x16xf32>
    %58 = vector.extract_strided_slice %15 {offsets = [0, 6, 0, 0], sizes = [2, 2, 2, 16], strides = [1, 1, 1, 1]} : vector<2x8x8x16xf32> to vector<2x2x2x16xf32>
    %59 = vector.extract_strided_slice %15 {offsets = [0, 6, 1, 0], sizes = [2, 2, 2, 16], strides = [1, 1, 1, 1]} : vector<2x8x8x16xf32> to vector<2x2x2x16xf32>
    %60 = vector.extract_strided_slice %15 {offsets = [0, 6, 2, 0], sizes = [2, 2, 2, 16], strides = [1, 1, 1, 1]} : vector<2x8x8x16xf32> to vector<2x2x2x16xf32>
    %61 = vector.extract_strided_slice %15 {offsets = [0, 6, 3, 0], sizes = [2, 2, 2, 16], strides = [1, 1, 1, 1]} : vector<2x8x8x16xf32> to vector<2x2x2x16xf32>
    %62 = vector.extract_strided_slice %15 {offsets = [0, 6, 4, 0], sizes = [2, 2, 2, 16], strides = [1, 1, 1, 1]} : vector<2x8x8x16xf32> to vector<2x2x2x16xf32>
    %63 = vector.extract_strided_slice %15 {offsets = [0, 6, 5, 0], sizes = [2, 2, 2, 16], strides = [1, 1, 1, 1]} : vector<2x8x8x16xf32> to vector<2x2x2x16xf32>
    %64 = vector.extract_strided_slice %15 {offsets = [0, 6, 6, 0], sizes = [2, 2, 2, 16], strides = [1, 1, 1, 1]} : vector<2x8x8x16xf32> to vector<2x2x2x16xf32>
    %65 = tpu.concatenate %16, %17, %18, %19, %20, %21, %22, %23, %24, %25, %26, %27, %28, %29, %30, %31 in 3 : vector<2x2x2x16xf32>, vector<2x2x2x16xf32>, vector<2x2x2x16xf32>, vector<2x2x2x16xf32>, vector<2x2x2x16xf32>, vector<2x2x2x16xf32>, vector<2x2x2x16xf32>, vector<2x2x2x16xf32>, vector<2x2x2x16xf32>, vector<2x2x2x16xf32>, vector<2x2x2x16xf32>, vector<2x2x2x16xf32>, vector<2x2x2x16xf32>, vector<2x2x2x16xf32>, vector<2x2x2x16xf32>, vector<2x2x2x16xf32> -> vector<2x2x2x256xf32>
    %66 = tpu.concatenate %32, %33, %34, %35, %36, %37, %38, %39, %40, %41, %42, %43, %44, %45, %46, %47 in 3 : vector<2x2x2x16xf32>, vector<2x2x2x16xf32>, vector<2x2x2x16xf32>, vector<2x2x2x16xf32>, vector<2x2x2x16xf32>, vector<2x2x2x16xf32>, vector<2x2x2x16xf32>, vector<2x2x2x16xf32>, vector<2x2x2x16xf32>, vector<2x2x2x16xf32>, vector<2x2x2x16xf32>, vector<2x2x2x16xf32>, vector<2x2x2x16xf32>, vector<2x2x2x16xf32>, vector<2x2x2x16xf32>, vector<2x2x2x16xf32> -> vector<2x2x2x256xf32>
    %67 = tpu.concatenate %48, %49, %50, %51, %52, %53, %54, %55, %56, %57, %58, %59, %60, %61, %62, %63 in 3 : vector<2x2x2x16xf32>, vector<2x2x2x16xf32>, vector<2x2x2x16xf32>, vector<2x2x2x16xf32>, vector<2x2x2x16xf32>, vector<2x2x2x16xf32>, vector<2x2x2x16xf32>, vector<2x2x2x16xf32>, vector<2x2x2x16xf32>, vector<2x2x2x16xf32>, vector<2x2x2x16xf32>, vector<2x2x2x16xf32>, vector<2x2x2x16xf32>, vector<2x2x2x16xf32>, vector<2x2x2x16xf32>, vector<2x2x2x16xf32> -> vector<2x2x2x256xf32>
    %68 = tpu.concatenate %65, %66, %67, %64 in 3 : vector<2x2x2x256xf32>, vector<2x2x2x256xf32>, vector<2x2x2x256xf32>, vector<2x2x2x16xf32> -> vector<2x2x2x784xf32>
    %69 = vector.extract_strided_slice %68 {offsets = [0, 0, 0, 0], sizes = [2, 1, 1, 784], strides = [1, 1, 1, 1]} : vector<2x2x2x784xf32> to vector<2x1x1x784xf32>
    %70 = vector.shape_cast %69 : vector<2x1x1x784xf32> to vector<2x784xf32>
    %71 = vector.extract_strided_slice %68 {offsets = [0, 0, 1, 0], sizes = [2, 1, 1, 784], strides = [1, 1, 1, 1]} : vector<2x2x2x784xf32> to vector<2x1x1x784xf32>
    %72 = vector.shape_cast %71 : vector<2x1x1x784xf32> to vector<2x784xf32>
    %73 = vector.extract_strided_slice %68 {offsets = [0, 1, 0, 0], sizes = [2, 1, 1, 784], strides = [1, 1, 1, 1]} : vector<2x2x2x784xf32> to vector<2x1x1x784xf32>
    %74 = vector.shape_cast %73 : vector<2x1x1x784xf32> to vector<2x784xf32>
    %75 = vector.extract_strided_slice %68 {offsets = [0, 1, 1, 0], sizes = [2, 1, 1, 784], strides = [1, 1, 1, 1]} : vector<2x2x2x784xf32> to vector<2x1x1x784xf32>
    %76 = vector.shape_cast %75 : vector<2x1x1x784xf32> to vector<2x784xf32>
    %77 = tpu.concatenate %70, %72, %74, %76 in 0 : vector<2x784xf32>, vector<2x784xf32>, vector<2x784xf32>, vector<2x784xf32> -> vector<8x784xf32>
    %c0_6 = arith.constant 0 : index
    %c0_7 = arith.constant 0 : index
    %78 = vector.load %arg2[%c0_6, %c0_7] : memref<784x32xf32, #tpu.memory_space<vmem>>, vector<784x32xf32>
    %cst_8 = arith.constant dense<0.000000e+00> : vector<8x32xf32>
    %79 = tpu.matmul %77, %78, %cst_8 {dimension_numbers = #tpu.dot_dimension_numbers<[1], [0], [0], [1], [0, 0, 1, 1], [], []>} : vector<8x784xf32>, vector<784x32xf32>, vector<8x32xf32> -> vector<8x32xf32>
    %80 = vector.extract_strided_slice %79 {offsets = [0, 0], sizes = [2, 32], strides = [1, 1]} : vector<8x32xf32> to vector<2x32xf32>
    %81 = vector.extract_strided_slice %79 {offsets = [2, 0], sizes = [2, 32], strides = [1, 1]} : vector<8x32xf32> to vector<2x32xf32>
    %82 = arith.maximumf %80, %81 : vector<2x32xf32>
    %83 = vector.extract_strided_slice %79 {offsets = [4, 0], sizes = [2, 32], strides = [1, 1]} : vector<8x32xf32> to vector<2x32xf32>
    %84 = vector.extract_strided_slice %79 {offsets = [6, 0], sizes = [2, 32], strides = [1, 1]} : vector<8x32xf32> to vector<2x32xf32>
    %85 = arith.maximumf %83, %84 : vector<2x32xf32>
    %86 = arith.maximumf %82, %85 : vector<2x32xf32>
    %c1 = arith.constant 1 : index
    %c0_9 = arith.constant 0 : index
    %87 = vector.load %arg4[%c1, %c0_9] : memref<8x128xf32, #tpu.memory_space<vmem>>, vector<1x32xf32>
    %88 = vector.broadcast %87 : vector<1x32xf32> to vector<2x32xf32>
    %89 = arith.addf %86, %88 : vector<2x32xf32>
    %cst_10 = arith.constant 0.000000e+00 : f32
    %90 = vector.broadcast %cst_10 : f32 to vector<2x32xf32>
    %91 = arith.maximumf %89, %90 : vector<2x32xf32>
    %c0_11 = arith.constant 0 : index
    %c0_12 = arith.constant 0 : index
    %92 = vector.load %arg3[%c0_11, %c0_12] : memref<240x128xf32, #tpu.memory_space<vmem>>, vector<32x120xf32>
    %cst_13 = arith.constant dense<0.000000e+00> : vector<2x120xf32>
    %93 = tpu.matmul %91, %92, %cst_13 {dimension_numbers = #tpu.dot_dimension_numbers<[1], [0], [0], [1], [0, 0, 1, 1], [], []>} : vector<2x32xf32>, vector<32x120xf32>, vector<2x120xf32> -> vector<2x120xf32>
    %c2 = arith.constant 2 : index
    %c0_14 = arith.constant 0 : index
    %94 = vector.load %arg4[%c2, %c0_14] : memref<8x128xf32, #tpu.memory_space<vmem>>, vector<1x120xf32>
    %95 = vector.broadcast %94 : vector<1x120xf32> to vector<2x120xf32>
    %96 = arith.addf %93, %95 : vector<2x120xf32>
    %cst_15 = arith.constant 0.000000e+00 : f32
    %97 = vector.broadcast %cst_15 : f32 to vector<2x120xf32>
    %98 = arith.maximumf %96, %97 : vector<2x120xf32>
    %c32 = arith.constant 32 : index
    %c0_16 = arith.constant 0 : index
    %99 = vector.load %arg3[%c32, %c0_16] : memref<240x128xf32, #tpu.memory_space<vmem>>, vector<120x84xf32>
    %cst_17 = arith.constant dense<0.000000e+00> : vector<2x84xf32>
    %100 = tpu.matmul %98, %99, %cst_17 {dimension_numbers = #tpu.dot_dimension_numbers<[1], [0], [0], [1], [0, 0, 1, 1], [], []>} : vector<2x120xf32>, vector<120x84xf32>, vector<2x84xf32> -> vector<2x84xf32>
    %c3 = arith.constant 3 : index
    %c0_18 = arith.constant 0 : index
    %101 = vector.load %arg4[%c3, %c0_18] : memref<8x128xf32, #tpu.memory_space<vmem>>, vector<1x84xf32>
    %102 = vector.broadcast %101 : vector<1x84xf32> to vector<2x84xf32>
    %103 = arith.addf %100, %102 : vector<2x84xf32>
    %cst_19 = arith.constant 0.000000e+00 : f32
    %104 = vector.broadcast %cst_19 : f32 to vector<2x84xf32>
    %105 = arith.maximumf %103, %104 : vector<2x84xf32>
    %c152 = arith.constant 152 : index
    %c0_20 = arith.constant 0 : index
    %106 = vector.load %arg3[%c152, %c0_20] : memref<240x128xf32, #tpu.memory_space<vmem>>, vector<84x10xf32>
    %cst_21 = arith.constant dense<0.000000e+00> : vector<2x10xf32>
    %107 = tpu.matmul %105, %106, %cst_21 {dimension_numbers = #tpu.dot_dimension_numbers<[1], [0], [0], [1], [0, 0, 1, 1], [], []>} : vector<2x84xf32>, vector<84x10xf32>, vector<2x10xf32> -> vector<2x10xf32>
    %c4 = arith.constant 4 : index
    %c0_22 = arith.constant 0 : index
    %108 = vector.load %arg4[%c4, %c0_22] : memref<8x128xf32, #tpu.memory_space<vmem>>, vector<1x10xf32>
    %109 = vector.broadcast %108 : vector<1x10xf32> to vector<2x10xf32>
    %110 = arith.addf %107, %109 : vector<2x10xf32>
    %c0_23 = arith.constant 0 : index
    %c0_24 = arith.constant 0 : index
    %111 = vector.load %arg5[%c0_23, %c0_24] : memref<2x10xf32, #tpu.memory_space<vmem>>, vector<2x10xf32>
    tpu.vector_store %arg5[%c0_23, %c0_24], %110 {strides = array<i32>} : memref<2x10xf32, #tpu.memory_space<vmem>>, vector<2x10xf32>,
    return
  }
}

</mosaic_0001>

<llo_original>
// kernel: net_forward.1
$region0: #{net_forward.1}
  #allocation0 [shape = 'u32[]', space=smem, size = 0x4, offset = 0x4, fixed_abs, tag = 'smem constant byte address 0x4 - core index']
  #allocation1 [shape = 'u32[144,128]{1,0:T(1,128)}', space=vmem, size = 0x12000, scoped, tag = 'internal scratch']
  %s0 = inlined_call_operand.vmem [shape: f32[512,49], index: 0, kind: input, shape index: {}]
  %s1 = inlined_call_operand.vmem [shape: f32[49,16], index: 1, kind: input, shape index: {}]
  %s2 = inlined_call_operand.vmem [shape: f32[784,32], index: 2, kind: input, shape index: {}]
  %s3 = inlined_call_operand.vmem [shape: f32[240,128], index: 3, kind: input, shape index: {}]
  %s4 = inlined_call_operand.vmem [shape: f32[8,128], index: 4, kind: input, shape index: {}]
  %s5 = inlined_call_operand.hbm [shape: f32[2,10], index: 5, kind: output, shape index: {}]
  %s6 = sld [smem:[#allocation0]]
  $region30: #{net_forward.1} parent=0
    _
  %s8 = ssub.s32 1, %s6
  %s9 = scalar_select 0, %s8, %s6
  $region1: #{net_forward.1} parent=0
    #allocation2 [shape = 'u8[1024]{0}', space=vmem, size = 0x400, scoped, tag = 'output window, operand 0, single buffered']
    #allocation3 [shape = 's32[1]{0}', space=sflag, size = 0x4, scoped, tag = 'scoped memory for net_forward.1']
    %10 = vsyncpa [#allocation3], 0
    // Predicated region
    $region2: #{net_forward.1} parent=1 // pred_check
      _
    $region3: #{net_forward.1} parent=1 // pred_check_branch
      %12 = sbr.rel (0) target = $region5
    $region4: #{net_forward.1} parent=1 // pred_region
      _
    $region5: #{net_forward.1} parent=1 // pred_fallthru
      _
    // Predicated region
    $region6: #{net_forward.1} parent=1 // pred_check
      _
    $region7: #{net_forward.1} parent=1 // pred_check_branch
      %14 = sbr.rel (0) target = $region9
    $region8: #{net_forward.1} parent=1 // pred_region
      _
    $region9: #{net_forward.1} parent=1 // pred_fallthru
      _
    // Predicated region
    $region10: #{net_forward.1} parent=1 // pred_check
      _
    $region11: #{net_forward.1} parent=1 // pred_check_branch
      %16 = sbr.rel (0) target = $region13
    $region12: #{net_forward.1} parent=1 // pred_region
      _
    $region13: #{net_forward.1} parent=1 // pred_fallthru
      _
    // Predicated region
    $region14: #{net_forward.1} parent=1 // pred_check
      _
    $region15: #{net_forward.1} parent=1 // pred_check_branch
      %18 = sbr.rel (0) target = $region17
    $region16: #{net_forward.1} parent=1 // pred_region
      _
    $region17: #{net_forward.1} parent=1 // pred_fallthru
      _
    // Predicated region
    $region18: #{net_forward.1} parent=1 // pred_check
      _
    $region19: #{net_forward.1} parent=1 // pred_check_branch
      %20 = sbr.rel (0) target = $region21
    $region20: #{net_forward.1} parent=1 // pred_region
      _
    $region21: #{net_forward.1} parent=1 // pred_fallthru
      _
    %v21 = vld [vmem:[%s0] sm:$0xff]
    %v22 = vld [vmem:[%s0 + $0x8] sm:$0xff]
    %v23 = vld [vmem:[%s0 + $0x10] sm:$0xff]
    %v24 = vld [vmem:[%s0 + $0x18] sm:$0xff]
    %v25 = vld [vmem:[%s0 + $0x20] sm:$0xff]
    %v26 = vld [vmem:[%s0 + $0x28] sm:$0xff]
    %v27 = vld [vmem:[%s0 + $0x30] sm:$0xff]
    %v28 = vld [vmem:[%s0 + $0x38] sm:$0xff]
    %v29 = vld [vmem:[%s0 + $0x40] sm:$0xff]
    %v30 = vld [vmem:[%s0 + $0x48] sm:$0xff]
    %v31 = vld [vmem:[%s0 + $0x50] sm:$0xff]
    %v32 = vld [vmem:[%s0 + $0x58] sm:$0xff]
    %v33 = vld [vmem:[%s0 + $0x60] sm:$0xff]
    %v34 = vld [vmem:[%s0 + $0x68] sm:$0xff]
    %v35 = vld [vmem:[%s0 + $0x70] sm:$0xff]
    %v36 = vld [vmem:[%s0 + $0x78] sm:$0xff]
    %v37 = vld [vmem:[%s0 + $0x80] sm:$0xff]
    %v38 = vld [vmem:[%s0 + $0x88] sm:$0xff]
    %v39 = vld [vmem:[%s0 + $0x90] sm:$0xff]
    %v40 = vld [vmem:[%s0 + $0x98] sm:$0xff]
    %v41 = vld [vmem:[%s0 + $0xa0] sm:$0xff]
    %v42 = vld [vmem:[%s0 + $0xa8] sm:$0xff]
    %v43 = vld [vmem:[%s0 + $0xb0] sm:$0xff]
    %v44 = vld [vmem:[%s0 + $0xb8] sm:$0xff]
    %v45 = vld [vmem:[%s0 + $0xc0] sm:$0xff]
    %v46 = vld [vmem:[%s0 + $0xc8] sm:$0xff]
    %v47 = vld [vmem:[%s0 + $0xd0] sm:$0xff]
    %v48 = vld [vmem:[%s0 + $0xd8] sm:$0xff]
    %v49 = vld [vmem:[%s0 + $0xe0] sm:$0xff]
    %v50 = vld [vmem:[%s0 + $0xe8] sm:$0xff]
    %v51 = vld [vmem:[%s0 + $0xf0] sm:$0xff]
    %v52 = vld [vmem:[%s0 + $0xf8] sm:$0xff]
    %v53 = vld [vmem:[%s0 + $0x100] sm:$0xff]
    %v54 = vld [vmem:[%s0 + $0x108] sm:$0xff]
    %v55 = vld [vmem:[%s0 + $0x110] sm:$0xff]
    %v56 = vld [vmem:[%s0 + $0x118] sm:$0xff]
    %v57 = vld [vmem:[%s0 + $0x120] sm:$0xff]
    %v58 = vld [vmem:[%s0 + $0x128] sm:$0xff]
    %v59 = vld [vmem:[%s0 + $0x130] sm:$0xff]
    %v60 = vld [vmem:[%s0 + $0x138] sm:$0xff]
    %v61 = vld [vmem:[%s0 + $0x140] sm:$0xff]
    %v62 = vld [vmem:[%s0 + $0x148] sm:$0xff]
    %v63 = vld [vmem:[%s0 + $0x150] sm:$0xff]
    %v64 = vld [vmem:[%s0 + $0x158] sm:$0xff]
    %v65 = vld [vmem:[%s0 + $0x160] sm:$0xff]
    %v66 = vld [vmem:[%s0 + $0x168] sm:$0xff]
    %v67 = vld [vmem:[%s0 + $0x170] sm:$0xff]
    %v68 = vld [vmem:[%s0 + $0x178] sm:$0xff]
    %v69 = vld [vmem:[%s0 + $0x180] sm:$0xff]
    %v70 = vld [vmem:[%s0 + $0x188] sm:$0xff]
    %v71 = vld [vmem:[%s0 + $0x190] sm:$0xff]
    %v72 = vld [vmem:[%s0 + $0x198] sm:$0xff]
    %v73 = vld [vmem:[%s0 + $0x1a0] sm:$0xff]
    %v74 = vld [vmem:[%s0 + $0x1a8] sm:$0xff]
    %v75 = vld [vmem:[%s0 + $0x1b0] sm:$0xff]
    %v76 = vld [vmem:[%s0 + $0x1b8] sm:$0xff]
    %v77 = vld [vmem:[%s0 + $0x1c0] sm:$0xff]
    %v78 = vld [vmem:[%s0 + $0x1c8] sm:$0xff]
    %v79 = vld [vmem:[%s0 + $0x1d0] sm:$0xff]
    %v80 = vld [vmem:[%s0 + $0x1d8] sm:$0xff]
    %v81 = vld [vmem:[%s0 + $0x1e0] sm:$0xff]
    %v82 = vld [vmem:[%s0 + $0x1e8] sm:$0xff]
    %v83 = vld [vmem:[%s0 + $0x1f0] sm:$0xff]
    %v84 = vld [vmem:[%s0 + $0x1f8] sm:$0xff]
    %v85 = vld [vmem:[%s1] sm:$0xff]
    %v86 = vld [vmem:[%s1 + $0x8] sm:$0xff]
    %v87 = vld [vmem:[%s1 + $0x10] sm:$0xff]
    %v88 = vld [vmem:[%s1 + $0x18] sm:$0xff]
    %v89 = vld [vmem:[%s1 + $0x20] sm:$0xff]
    %v90 = vld [vmem:[%s1 + $0x28] sm:$0xff]
    %v91 = vld [vmem:[%s1 + $0x30] sm:$0x1]
    %vm92 = vcmask 400384
    %v94 = vsel %vm92, %v21, 0
    %v97 = vsel %vm92, %v22, 0
    %v100 = vsel %vm92, %v23, 0
    %v103 = vsel %vm92, %v24, 0
    %v106 = vsel %vm92, %v25, 0
    %v109 = vsel %vm92, %v26, 0
    %v112 = vsel %vm92, %v27, 0
    %v115 = vsel %vm92, %v28, 0
    %v118 = vsel %vm92, %v29, 0
    %v121 = vsel %vm92, %v30, 0
    %v124 = vsel %vm92, %v31, 0
    %v127 = vsel %vm92, %v32, 0
    %v130 = vsel %vm92, %v33, 0
    %v133 = vsel %vm92, %v34, 0
    %v136 = vsel %vm92, %v35, 0
    %v139 = vsel %vm92, %v36, 0
    %v142 = vsel %vm92, %v37, 0
    %v145 = vsel %vm92, %v38, 0
    %v148 = vsel %vm92, %v39, 0
    %v151 = vsel %vm92, %v40, 0
    %v154 = vsel %vm92, %v41, 0
    %v157 = vsel %vm92, %v42, 0
    %v160 = vsel %vm92, %v43, 0
    %v163 = vsel %vm92, %v44, 0
    %v166 = vsel %vm92, %v45, 0
    %v169 = vsel %vm92, %v46, 0
    %v172 = vsel %vm92, %v47, 0
    %v175 = vsel %vm92, %v48, 0
    %v178 = vsel %vm92, %v49, 0
    %v181 = vsel %vm92, %v50, 0
    %v184 = vsel %vm92, %v51, 0
    %v187 = vsel %vm92, %v52, 0
    %v190 = vsel %vm92, %v53, 0
    %v193 = vsel %vm92, %v54, 0
    %v196 = vsel %vm92, %v55, 0
    %v199 = vsel %vm92, %v56, 0
    %v202 = vsel %vm92, %v57, 0
    %v205 = vsel %vm92, %v58, 0
    %v208 = vsel %vm92, %v59, 0
    %v211 = vsel %vm92, %v60, 0
    %v214 = vsel %vm92, %v61, 0
    %v217 = vsel %vm92, %v62, 0
    %v220 = vsel %vm92, %v63, 0
    %v223 = vsel %vm92, %v64, 0
    %v226 = vsel %vm92, %v65, 0
    %v229 = vsel %vm92, %v66, 0
    %v232 = vsel %vm92, %v67, 0
    %v235 = vsel %vm92, %v68, 0
    %v238 = vsel %vm92, %v69, 0
    %v241 = vsel %vm92, %v70, 0
    %v244 = vsel %vm92, %v71, 0
    %v247 = vsel %vm92, %v72, 0
    %v250 = vsel %vm92, %v73, 0
    %v253 = vsel %vm92, %v74, 0
    %v256 = vsel %vm92, %v75, 0
    %v259 = vsel %vm92, %v76, 0
    %v262 = vsel %vm92, %v77, 0
    %v265 = vsel %vm92, %v78, 0
    %v268 = vsel %vm92, %v79, 0
    %v271 = vsel %vm92, %v80, 0
    %v274 = vsel %vm92, %v81, 0
    %v277 = vsel %vm92, %v82, 0
    %v280 = vsel %vm92, %v83, 0
    %v283 = vsel %vm92, %v84, 0
    %vm285 = vcmask 1040384
    %v287 = vsel %vm285, %v91, 0
    %289 = vmatprep.subr.mxu0 0.0
    %290 = vmatpush1.msra.mxu0 0.0
    %291 = vmatprep.subr.mxu0 0.0
    %292 = vmatpush1.msra.mxu0 0.0
    %293 = vmatprep.subr.mxu0 0.0
    %294 = vmatpush1.msra.mxu0 0.0
    %295 = vmatprep.subr.mxu0 0.0
    %296 = vmatpush1.msra.mxu0 0.0
    %297 = vmatprep.subr.mxu0 0.0
    %298 = vmatpush1.msra.mxu0 0.0
    %299 = vmatprep.subr.mxu0 0.0
    %300 = vmatpush1.msra.mxu0 0.0
    %301 = vmatprep.subr.mxu0 0.0
    %302 = vmatpush1.msra.mxu0 0.0
    %303 = vmatprep.subr.mxu0 0.0
    %304 = vmatpush1.msra.mxu0 0.0
    %305 = vmatprep.subr.mxu0 0.0
    %306 = vmatpush1.msra.mxu0 0.0
    %307 = vmatprep.subr.mxu0 0.0
    %308 = vmatpush1.msra.mxu0 %v287
    %309 = vmatprep.subr.mxu0 0.0
    %310 = vmatpush1.msra.mxu0 %v90
    %311 = vmatprep.subr.mxu0 0.0
    %312 = vmatpush1.msra.mxu0 %v89
    %313 = vmatprep.subr.mxu0 0.0
    %314 = vmatpush1.msra.mxu0 %v88
    %315 = vmatprep.subr.mxu0 0.0
    %316 = vmatpush1.msra.mxu0 %v87
    %317 = vmatprep.subr.mxu0 0.0
    %318 = vmatpush1.msra.mxu0 %v86
    %319 = vmatprep.subr.mxu0 0.0
    %320 = vmatpush1.msra.mxu0 %v85
    %321 = vmatprep.subr.mxu0 0.0
    %322 = vmatpush2.msra.mxu0 0.0
    %323 = vmatprep.subr.mxu0 0.0
    %324 = vmatpush2.msra.mxu0 0.0
    %325 = vmatprep.subr.mxu0 0.0
    %326 = vmatpush2.msra.mxu0 0.0
    %327 = vmatprep.subr.mxu0 0.0
    %328 = vmatpush2.msra.mxu0 0.0
    %329 = vmatprep.subr.mxu0 0.0
    %330 = vmatpush2.msra.mxu0 0.0
    %331 = vmatprep.subr.mxu0 0.0
    %332 = vmatpush2.msra.mxu0 0.0
    %333 = vmatprep.subr.mxu0 0.0
    %334 = vmatpush2.msra.mxu0 0.0
    %335 = vmatprep.subr.mxu0 0.0
    %336 = vmatpush2.msra.mxu0 0.0
    %337 = vmatprep.subr.mxu0 0.0
    %338 = vmatpush2.msra.mxu0 0.0
    %339 = vmatprep.subr.mxu0 0.0
    %340 = vmatpush2.msra.mxu0 0.0
    %341 = vmatprep.subr.mxu0 0.0
    %342 = vmatpush2.msra.mxu0 0.0
    %343 = vmatprep.subr.mxu0 0.0
    %344 = vmatpush2.msra.mxu0 0.0
    %345 = vmatprep.subr.mxu0 0.0
    %346 = vmatpush2.msra.mxu0 0.0
    %347 = vmatprep.subr.mxu0 0.0
    %348 = vmatpush2.msra.mxu0 0.0
    %349 = vmatprep.subr.mxu0 0.0
    %350 = vmatpush2.msra.mxu0 0.0
    %351 = vmatprep.subr.mxu0 0.0
    %352 = vmatpush2.msra.mxu0 0.0
    %353 = vmatprep.mubr.f32.mxu0 0.0
    %354 = vmatmul.mubr.f32.gmra.mxu0 %v94
    %v355 = vpop.f32.mrf.mxu0
    %v356 = vadd.f32 0.0, %v355
    %v357 = vpop.f32.mrf.mxu0
    %358 = vmatprep.mubr.f32.mxu0 0.0
    %359 = vmatmul.mubr.f32.gmra.mxu0 %v97
    %v360 = vpop.f32.mrf.mxu0
    %v361 = vadd.f32 0.0, %v360
    %v362 = vpop.f32.mrf.mxu0
    %363 = vmatprep.mubr.f32.mxu0 0.0
    %364 = vmatmul.mubr.f32.gmra.mxu0 %v100
    %v365 = vpop.f32.mrf.mxu0
    %v366 = vadd.f32 0.0, %v365
    %v367 = vpop.f32.mrf.mxu0
    %368 = vmatprep.mubr.f32.mxu0 0.0
    %369 = vmatmul.mubr.f32.gmra.mxu0 %v103
    %v370 = vpop.f32.mrf.mxu0
    %v371 = vadd.f32 0.0, %v370
    %v372 = vpop.f32.mrf.mxu0
    %373 = vmatprep.mubr.f32.mxu0 0.0
    %374 = vmatmul.mubr.f32.gmra.mxu0 %v106
    %v375 = vpop.f32.mrf.mxu0
    %v376 = vadd.f32 0.0, %v375
    %v377 = vpop.f32.mrf.mxu0
    %378 = vmatprep.mubr.f32.mxu0 0.0
    %379 = vmatmul.mubr.f32.gmra.mxu0 %v109
    %v380 = vpop.f32.mrf.mxu0
    %v381 = vadd.f32 0.0, %v380
    %v382 = vpop.f32.mrf.mxu0
    %383 = vmatprep.mubr.f32.mxu0 0.0
    %384 = vmatmul.mubr.f32.gmra.mxu0 %v112
    %v385 = vpop.f32.mrf.mxu0
    %v386 = vadd.f32 0.0, %v385
    %v387 = vpop.f32.mrf.mxu0
    %388 = vmatprep.mubr.f32.mxu0 0.0
    %389 = vmatmul.mubr.f32.gmra.mxu0 %v115
    %v390 = vpop.f32.mrf.mxu0
    %v391 = vadd.f32 0.0, %v390
    %v392 = vpop.f32.mrf.mxu0
    %393 = vmatprep.mubr.f32.mxu0 0.0
    %394 = vmatmul.mubr.f32.gmra.mxu0 %v118
    %v395 = vpop.f32.mrf.mxu0
    %v396 = vadd.f32 0.0, %v395
    %v397 = vpop.f32.mrf.mxu0
    %398 = vmatprep.mubr.f32.mxu0 0.0
    %399 = vmatmul.mubr.f32.gmra.mxu0 %v121
    %v400 = vpop.f32.mrf.mxu0
    %v401 = vadd.f32 0.0, %v400
    %v402 = vpop.f32.mrf.mxu0
    %403 = vmatprep.mubr.f32.mxu0 0.0
    %404 = vmatmul.mubr.f32.gmra.mxu0 %v124
    %v405 = vpop.f32.mrf.mxu0
    %v406 = vadd.f32 0.0, %v405
    %v407 = vpop.f32.mrf.mxu0
    %408 = vmatprep.mubr.f32.mxu0 0.0
    %409 = vmatmul.mubr.f32.gmra.mxu0 %v127
    %v410 = vpop.f32.mrf.mxu0
    %v411 = vadd.f32 0.0, %v410
    %v412 = vpop.f32.mrf.mxu0
    %413 = vmatprep.mubr.f32.mxu0 0.0
    %414 = vmatmul.mubr.f32.gmra.mxu0 %v130
    %v415 = vpop.f32.mrf.mxu0
    %v416 = vadd.f32 0.0, %v415
    %v417 = vpop.f32.mrf.mxu0
    %418 = vmatprep.mubr.f32.mxu0 0.0
    %419 = vmatmul.mubr.f32.gmra.mxu0 %v133
    %v420 = vpop.f32.mrf.mxu0
    %v421 = vadd.f32 0.0, %v420
    %v422 = vpop.f32.mrf.mxu0
    %423 = vmatprep.mubr.f32.mxu0 0.0
    %424 = vmatmul.mubr.f32.gmra.mxu0 %v136
    %v425 = vpop.f32.mrf.mxu0
    %v426 = vadd.f32 0.0, %v425
    %v427 = vpop.f32.mrf.mxu0
    %428 = vmatprep.mubr.f32.mxu0 0.0
    %429 = vmatmul.mubr.f32.gmra.mxu0 %v139
    %v430 = vpop.f32.mrf.mxu0
    %v431 = vadd.f32 0.0, %v430
    %v432 = vpop.f32.mrf.mxu0
    %433 = vmatprep.mubr.f32.mxu0 0.0
    %434 = vmatmul.mubr.f32.gmra.mxu0 %v142
    %v435 = vpop.f32.mrf.mxu0
    %v436 = vadd.f32 0.0, %v435
    %v437 = vpop.f32.mrf.mxu0
    %438 = vmatprep.mubr.f32.mxu0 0.0
    %439 = vmatmul.mubr.f32.gmra.mxu0 %v145
    %v440 = vpop.f32.mrf.mxu0
    %v441 = vadd.f32 0.0, %v440
    %v442 = vpop.f32.mrf.mxu0
    %443 = vmatprep.mubr.f32.mxu0 0.0
    %444 = vmatmul.mubr.f32.gmra.mxu0 %v148
    %v445 = vpop.f32.mrf.mxu0
    %v446 = vadd.f32 0.0, %v445
    %v447 = vpop.f32.mrf.mxu0
    %448 = vmatprep.mubr.f32.mxu0 0.0
    %449 = vmatmul.mubr.f32.gmra.mxu0 %v151
    %v450 = vpop.f32.mrf.mxu0
    %v451 = vadd.f32 0.0, %v450
    %v452 = vpop.f32.mrf.mxu0
    %453 = vmatprep.mubr.f32.mxu0 0.0
    %454 = vmatmul.mubr.f32.gmra.mxu0 %v154
    %v455 = vpop.f32.mrf.mxu0
    %v456 = vadd.f32 0.0, %v455
    %v457 = vpop.f32.mrf.mxu0
    %458 = vmatprep.mubr.f32.mxu0 0.0
    %459 = vmatmul.mubr.f32.gmra.mxu0 %v157
    %v460 = vpop.f32.mrf.mxu0
    %v461 = vadd.f32 0.0, %v460
    %v462 = vpop.f32.mrf.mxu0
    %463 = vmatprep.mubr.f32.mxu0 0.0
    %464 = vmatmul.mubr.f32.gmra.mxu0 %v160
    %v465 = vpop.f32.mrf.mxu0
    %v466 = vadd.f32 0.0, %v465
    %v467 = vpop.f32.mrf.mxu0
    %468 = vmatprep.mubr.f32.mxu0 0.0
    %469 = vmatmul.mubr.f32.gmra.mxu0 %v163
    %v470 = vpop.f32.mrf.mxu0
    %v471 = vadd.f32 0.0, %v470
    %v472 = vpop.f32.mrf.mxu0
    %473 = vmatprep.mubr.f32.mxu0 0.0
    %474 = vmatmul.mubr.f32.gmra.mxu0 %v166
    %v475 = vpop.f32.mrf.mxu0
    %v476 = vadd.f32 0.0, %v475
    %v477 = vpop.f32.mrf.mxu0
    %478 = vmatprep.mubr.f32.mxu0 0.0
    %479 = vmatmul.mubr.f32.gmra.mxu0 %v169
    %v480 = vpop.f32.mrf.mxu0
    %v481 = vadd.f32 0.0, %v480
    %v482 = vpop.f32.mrf.mxu0
    %483 = vmatprep.mubr.f32.mxu0 0.0
    %484 = vmatmul.mubr.f32.gmra.mxu0 %v172
    %v485 = vpop.f32.mrf.mxu0
    %v486 = vadd.f32 0.0, %v485
    %v487 = vpop.f32.mrf.mxu0
    %488 = vmatprep.mubr.f32.mxu0 0.0
    %489 = vmatmul.mubr.f32.gmra.mxu0 %v175
    %v490 = vpop.f32.mrf.mxu0
    %v491 = vadd.f32 0.0, %v490
    %v492 = vpop.f32.mrf.mxu0
    %493 = vmatprep.mubr.f32.mxu0 0.0
    %494 = vmatmul.mubr.f32.gmra.mxu0 %v178
    %v495 = vpop.f32.mrf.mxu0
    %v496 = vadd.f32 0.0, %v495
    %v497 = vpop.f32.mrf.mxu0
    %498 = vmatprep.mubr.f32.mxu0 0.0
    %499 = vmatmul.mubr.f32.gmra.mxu0 %v181
    %v500 = vpop.f32.mrf.mxu0
    %v501 = vadd.f32 0.0, %v500
    %v502 = vpop.f32.mrf.mxu0
    %503 = vmatprep.mubr.f32.mxu0 0.0
    %504 = vmatmul.mubr.f32.gmra.mxu0 %v184
    %v505 = vpop.f32.mrf.mxu0
    %v506 = vadd.f32 0.0, %v505
    %v507 = vpop.f32.mrf.mxu0
    %508 = vmatprep.mubr.f32.mxu0 0.0
    %509 = vmatmul.mubr.f32.gmra.mxu0 %v187
    %v510 = vpop.f32.mrf.mxu0
    %v511 = vadd.f32 0.0, %v510
    %v512 = vpop.f32.mrf.mxu0
    %513 = vmatprep.mubr.f32.mxu0 0.0
    %514 = vmatmul.mubr.f32.gmra.mxu0 %v190
    %v515 = vpop.f32.mrf.mxu0
    %v516 = vadd.f32 0.0, %v515
    %v517 = vpop.f32.mrf.mxu0
    %518 = vmatprep.mubr.f32.mxu0 0.0
    %519 = vmatmul.mubr.f32.gmra.mxu0 %v193
    %v520 = vpop.f32.mrf.mxu0
    %v521 = vadd.f32 0.0, %v520
    %v522 = vpop.f32.mrf.mxu0
    %523 = vmatprep.mubr.f32.mxu0 0.0
    %524 = vmatmul.mubr.f32.gmra.mxu0 %v196
    %v525 = vpop.f32.mrf.mxu0
    %v526 = vadd.f32 0.0, %v525
    %v527 = vpop.f32.mrf.mxu0
    %528 = vmatprep.mubr.f32.mxu0 0.0
    %529 = vmatmul.mubr.f32.gmra.mxu0 %v199
    %v530 = vpop.f32.mrf.mxu0
    %v531 = vadd.f32 0.0, %v530
    %v532 = vpop.f32.mrf.mxu0
    %533 = vmatprep.mubr.f32.mxu0 0.0
    %534 = vmatmul.mubr.f32.gmra.mxu0 %v202
    %v535 = vpop.f32.mrf.mxu0
    %v536 = vadd.f32 0.0, %v535
    %v537 = vpop.f32.mrf.mxu0
    %538 = vmatprep.mubr.f32.mxu0 0.0
    %539 = vmatmul.mubr.f32.gmra.mxu0 %v205
    %v540 = vpop.f32.mrf.mxu0
    %v541 = vadd.f32 0.0, %v540
    %v542 = vpop.f32.mrf.mxu0
    %543 = vmatprep.mubr.f32.mxu0 0.0
    %544 = vmatmul.mubr.f32.gmra.mxu0 %v208
    %v545 = vpop.f32.mrf.mxu0
    %v546 = vadd.f32 0.0, %v545
    %v547 = vpop.f32.mrf.mxu0
    %548 = vmatprep.mubr.f32.mxu0 0.0
    %549 = vmatmul.mubr.f32.gmra.mxu0 %v211
    %v550 = vpop.f32.mrf.mxu0
    %v551 = vadd.f32 0.0, %v550
    %v552 = vpop.f32.mrf.mxu0
    %553 = vmatprep.mubr.f32.mxu0 0.0
    %554 = vmatmul.mubr.f32.gmra.mxu0 %v214
    %v555 = vpop.f32.mrf.mxu0
    %v556 = vadd.f32 0.0, %v555
    %v557 = vpop.f32.mrf.mxu0
    %558 = vmatprep.mubr.f32.mxu0 0.0
    %559 = vmatmul.mubr.f32.gmra.mxu0 %v217
    %v560 = vpop.f32.mrf.mxu0
    %v561 = vadd.f32 0.0, %v560
    %v562 = vpop.f32.mrf.mxu0
    %563 = vmatprep.mubr.f32.mxu0 0.0
    %564 = vmatmul.mubr.f32.gmra.mxu0 %v220
    %v565 = vpop.f32.mrf.mxu0
    %v566 = vadd.f32 0.0, %v565
    %v567 = vpop.f32.mrf.mxu0
    %568 = vmatprep.mubr.f32.mxu0 0.0
    %569 = vmatmul.mubr.f32.gmra.mxu0 %v223
    %v570 = vpop.f32.mrf.mxu0
    %v571 = vadd.f32 0.0, %v570
    %v572 = vpop.f32.mrf.mxu0
    %573 = vmatprep.mubr.f32.mxu0 0.0
    %574 = vmatmul.mubr.f32.gmra.mxu0 %v226
    %v575 = vpop.f32.mrf.mxu0
    %v576 = vadd.f32 0.0, %v575
    %v577 = vpop.f32.mrf.mxu0
    %578 = vmatprep.mubr.f32.mxu0 0.0
    %579 = vmatmul.mubr.f32.gmra.mxu0 %v229
    %v580 = vpop.f32.mrf.mxu0
    %v581 = vadd.f32 0.0, %v580
    %v582 = vpop.f32.mrf.mxu0
    %583 = vmatprep.mubr.f32.mxu0 0.0
    %584 = vmatmul.mubr.f32.gmra.mxu0 %v232
    %v585 = vpop.f32.mrf.mxu0
    %v586 = vadd.f32 0.0, %v585
    %v587 = vpop.f32.mrf.mxu0
    %588 = vmatprep.mubr.f32.mxu0 0.0
    %589 = vmatmul.mubr.f32.gmra.mxu0 %v235
    %v590 = vpop.f32.mrf.mxu0
    %v591 = vadd.f32 0.0, %v590
    %v592 = vpop.f32.mrf.mxu0
    %593 = vmatprep.mubr.f32.mxu0 0.0
    %594 = vmatmul.mubr.f32.gmra.mxu0 %v238
    %v595 = vpop.f32.mrf.mxu0
    %v596 = vadd.f32 0.0, %v595
    %v597 = vpop.f32.mrf.mxu0
    %598 = vmatprep.mubr.f32.mxu0 0.0
    %599 = vmatmul.mubr.f32.gmra.mxu0 %v241
    %v600 = vpop.f32.mrf.mxu0
    %v601 = vadd.f32 0.0, %v600
    %v602 = vpop.f32.mrf.mxu0
    %603 = vmatprep.mubr.f32.mxu0 0.0
    %604 = vmatmul.mubr.f32.gmra.mxu0 %v244
    %v605 = vpop.f32.mrf.mxu0
    %v606 = vadd.f32 0.0, %v605
    %v607 = vpop.f32.mrf.mxu0
    %608 = vmatprep.mubr.f32.mxu0 0.0
    %609 = vmatmul.mubr.f32.gmra.mxu0 %v247
    %v610 = vpop.f32.mrf.mxu0
    %v611 = vadd.f32 0.0, %v610
    %v612 = vpop.f32.mrf.mxu0
    %613 = vmatprep.mubr.f32.mxu0 0.0
    %614 = vmatmul.mubr.f32.gmra.mxu0 %v250
    %v615 = vpop.f32.mrf.mxu0
    %v616 = vadd.f32 0.0, %v615
    %v617 = vpop.f32.mrf.mxu0
    %618 = vmatprep.mubr.f32.mxu0 0.0
    %619 = vmatmul.mubr.f32.gmra.mxu0 %v253
    %v620 = vpop.f32.mrf.mxu0
    %v621 = vadd.f32 0.0, %v620
    %v622 = vpop.f32.mrf.mxu0
    %623 = vmatprep.mubr.f32.mxu0 0.0
    %624 = vmatmul.mubr.f32.gmra.mxu0 %v256
    %v625 = vpop.f32.mrf.mxu0
    %v626 = vadd.f32 0.0, %v625
    %v627 = vpop.f32.mrf.mxu0
    %628 = vmatprep.mubr.f32.mxu0 0.0
    %629 = vmatmul.mubr.f32.gmra.mxu0 %v259
    %v630 = vpop.f32.mrf.mxu0
    %v631 = vadd.f32 0.0, %v630
    %v632 = vpop.f32.mrf.mxu0
    %633 = vmatprep.mubr.f32.mxu0 0.0
    %634 = vmatmul.mubr.f32.gmra.mxu0 %v262
    %v635 = vpop.f32.mrf.mxu0
    %v636 = vadd.f32 0.0, %v635
    %v637 = vpop.f32.mrf.mxu0
    %638 = vmatprep.mubr.f32.mxu0 0.0
    %639 = vmatmul.mubr.f32.gmra.mxu0 %v265
    %v640 = vpop.f32.mrf.mxu0
    %v641 = vadd.f32 0.0, %v640
    %v642 = vpop.f32.mrf.mxu0
    %643 = vmatprep.mubr.f32.mxu0 0.0
    %644 = vmatmul.mubr.f32.gmra.mxu0 %v268
    %v645 = vpop.f32.mrf.mxu0
    %v646 = vadd.f32 0.0, %v645
    %v647 = vpop.f32.mrf.mxu0
    %648 = vmatprep.mubr.f32.mxu0 0.0
    %649 = vmatmul.mubr.f32.gmra.mxu0 %v271
    %v650 = vpop.f32.mrf.mxu0
    %v651 = vadd.f32 0.0, %v650
    %v652 = vpop.f32.mrf.mxu0
    %653 = vmatprep.mubr.f32.mxu0 0.0
    %654 = vmatmul.mubr.f32.gmra.mxu0 %v274
    %v655 = vpop.f32.mrf.mxu0
    %v656 = vadd.f32 0.0, %v655
    %v657 = vpop.f32.mrf.mxu0
    %658 = vmatprep.mubr.f32.mxu0 0.0
    %659 = vmatmul.mubr.f32.gmra.mxu0 %v277
    %v660 = vpop.f32.mrf.mxu0
    %v661 = vadd.f32 0.0, %v660
    %v662 = vpop.f32.mrf.mxu0
    %663 = vmatprep.mubr.f32.mxu0 0.0
    %664 = vmatmul.mubr.f32.gmra.mxu0 %v280
    %v665 = vpop.f32.mrf.mxu0
    %v666 = vadd.f32 0.0, %v665
    %v667 = vpop.f32.mrf.mxu0
    %668 = vmatprep.mubr.f32.mxu0 0.0
    %669 = vmatmul.mubr.f32.gmra.mxu0 %v283
    %v670 = vpop.f32.mrf.mxu0
    %v671 = vadd.f32 0.0, %v670
    %v672 = vpop.f32.mrf.mxu0
    %673 = vdwg.mxu0
    %v674 = vmax.f32 %v356, %v436
    %v675 = vmax.f32 %v361, %v441
    %v676 = vmax.f32 %v366, %v446
    %v677 = vmax.f32 %v371, %v451
    %v678 = vmax.f32 %v376, %v456
    %v679 = vmax.f32 %v381, %v461
    %v680 = vmax.f32 %v386, %v466
    %v681 = vmax.f32 %v391, %v471
    %v682 = vmax.f32 %v396, %v476
    %v683 = vmax.f32 %v401, %v481
    %v684 = vmax.f32 %v406, %v486
    %v685 = vmax.f32 %v411, %v491
    %v686 = vmax.f32 %v416, %v496
    %v687 = vmax.f32 %v421, %v501
    %v688 = vmax.f32 %v426, %v506
    %v689 = vmax.f32 %v431, %v511
    %v690 = vmax.f32 %v516, %v596
    %v691 = vmax.f32 %v521, %v601
    %v692 = vmax.f32 %v526, %v606
    %v693 = vmax.f32 %v531, %v611
    %v694 = vmax.f32 %v536, %v616
    %v695 = vmax.f32 %v541, %v621
    %v696 = vmax.f32 %v546, %v626
    %v697 = vmax.f32 %v551, %v631
    %v698 = vmax.f32 %v556, %v636
    %v699 = vmax.f32 %v561, %v641
    %v700 = vmax.f32 %v566, %v646
    %v701 = vmax.f32 %v571, %v651
    %v702 = vmax.f32 %v576, %v656
    %v703 = vmax.f32 %v581, %v661
    %v704 = vmax.f32 %v586, %v666
    %v705 = vmax.f32 %v591, %v671
    %v706 = vmax.f32 %v674, %v690
    %v707 = vmax.f32 %v675, %v691
    %v708 = vmax.f32 %v676, %v692
    %v709 = vmax.f32 %v677, %v693
    %v710 = vmax.f32 %v678, %v694
    %v711 = vmax.f32 %v679, %v695
    %v712 = vmax.f32 %v680, %v696
    %v713 = vmax.f32 %v681, %v697
    %v714 = vmax.f32 %v682, %v698
    %v715 = vmax.f32 %v683, %v699
    %v716 = vmax.f32 %v684, %v700
    %v717 = vmax.f32 %v685, %v701
    %v718 = vmax.f32 %v686, %v702
    %v719 = vmax.f32 %v687, %v703
    %v720 = vmax.f32 %v688, %v704
    %v721 = vmax.f32 %v689, %v705
    %v722 = vld [vmem:[%s4] sm:$0x1]
    %v723 = vlaneseq
    %v724 = vshrl.u32 %v723, 7
    %v725 = vsub.s32 0, %v724
    %v726 = vrot.slane %v722, %v725
    %v727 = vadd.f32 %v706, %v726
    %v728 = vadd.f32 %v707, %v726
    %v729 = vadd.f32 %v708, %v726
    %v730 = vadd.f32 %v709, %v726
    %v731 = vadd.f32 %v710, %v726
    %v732 = vadd.f32 %v711, %v726
    %v733 = vadd.f32 %v712, %v726
    %v734 = vadd.f32 %v713, %v726
    %v735 = vadd.f32 %v714, %v726
    %v736 = vadd.f32 %v715, %v726
    %v737 = vadd.f32 %v716, %v726
    %v738 = vadd.f32 %v717, %v726
    %v739 = vadd.f32 %v718, %v726
    %v740 = vadd.f32 %v719, %v726
    %v741 = vadd.f32 %v720, %v726
    %v742 = vadd.f32 %v721, %v726
    %v743 = vmax.f32 %v727, 0.0
    %v744 = vmax.f32 %v728, 0.0
    %v745 = vmax.f32 %v729, 0.0
    %v746 = vmax.f32 %v730, 0.0
    %v747 = vmax.f32 %v731, 0.0
    %v748 = vmax.f32 %v732, 0.0
    %v749 = vmax.f32 %v733, 0.0
    %v750 = vmax.f32 %v734, 0.0
    %v751 = vmax.f32 %v735, 0.0
    %v752 = vmax.f32 %v736, 0.0
    %v753 = vmax.f32 %v737, 0.0
    %v754 = vmax.f32 %v738, 0.0
    %v755 = vmax.f32 %v739, 0.0
    %v756 = vmax.f32 %v740, 0.0
    %v757 = vmax.f32 %v741, 0.0
    %v758 = vmax.f32 %v742, 0.0
    %v763 = vrot.slane %v743, 1
    %v764 = vrot.slane %v744, 1
    %v765 = vrot.slane %v751, 1
    %v766 = vrot.slane %v752, 1
    %767 = vrot.lane.b32.xlu0 %v763, 16
    %v768 = vpop.permute.xlu0 %767
    %769 = vrot.lane.b32.xlu0 %v764, 16
    %v770 = vpop.permute.xlu0 %769
    %771 = vrot.lane.b32.xlu0 %v765, 16
    %v772 = vpop.permute.xlu0 %771
    %773 = vrot.lane.b32.xlu0 %v766, 16
    %v774 = vpop.permute.xlu0 %773
    %v779 = vrot.slane %v743, 2
    %v780 = vrot.slane %v744, 2
    %v781 = vrot.slane %v751, 2
    %v782 = vrot.slane %v752, 2
    %783 = vrot.lane.b32.xlu0 %v779, 32
    %v784 = vpop.permute.xlu0 %783
    %785 = vrot.lane.b32.xlu0 %v780, 32
    %v786 = vpop.permute.xlu0 %785
    %787 = vrot.lane.b32.xlu0 %v781, 32
    %v788 = vpop.permute.xlu0 %787
    %789 = vrot.lane.b32.xlu0 %v782, 32
    %v790 = vpop.permute.xlu0 %789
    %v795 = vrot.slane %v743, 3
    %v796 = vrot.slane %v744, 3
    %v797 = vrot.slane %v751, 3
    %v798 = vrot.slane %v752, 3
    %799 = vrot.lane.b32.xlu0 %v795, 48
    %v800 = vpop.permute.xlu0 %799
    %801 = vrot.lane.b32.xlu0 %v796, 48
    %v802 = vpop.permute.xlu0 %801
    %803 = vrot.lane.b32.xlu0 %v797, 48
    %v804 = vpop.permute.xlu0 %803
    %805 = vrot.lane.b32.xlu0 %v798, 48
    %v806 = vpop.permute.xlu0 %805
    %v811 = vrot.slane %v743, 4
    %v812 = vrot.slane %v744, 4
    %v813 = vrot.slane %v751, 4
    %v814 = vrot.slane %v752, 4
    %815 = vrot.lane.b32.xlu0 %v811, 64
    %v816 = vpop.permute.xlu0 %815
    %817 = vrot.lane.b32.xlu0 %v812, 64
    %v818 = vpop.permute.xlu0 %817
    %819 = vrot.lane.b32.xlu0 %v813, 64
    %v820 = vpop.permute.xlu0 %819
    %821 = vrot.lane.b32.xlu0 %v814, 64
    %v822 = vpop.permute.xlu0 %821
    %v827 = vrot.slane %v743, 5
    %v828 = vrot.slane %v744, 5
    %v829 = vrot.slane %v751, 5
    %v830 = vrot.slane %v752, 5
    %831 = vrot.lane.b32.xlu0 %v827, 80
    %v832 = vpop.permute.xlu0 %831
    %833 = vrot.lane.b32.xlu0 %v828, 80
    %v834 = vpop.permute.xlu0 %833
    %835 = vrot.lane.b32.xlu0 %v829, 80
    %v836 = vpop.permute.xlu0 %835
    %837 = vrot.lane.b32.xlu0 %v830, 80
    %v838 = vpop.permute.xlu0 %837
    %v843 = vrot.slane %v743, 6
    %v844 = vrot.slane %v744, 6
    %v845 = vrot.slane %v751, 6
    %v846 = vrot.slane %v752, 6
    %847 = vrot.lane.b32.xlu0 %v843, 96
    %v848 = vpop.permute.xlu0 %847
    %849 = vrot.lane.b32.xlu0 %v844, 96
    %v850 = vpop.permute.xlu0 %849
    %851 = vrot.lane.b32.xlu0 %v845, 96
    %v852 = vpop.permute.xlu0 %851
    %853 = vrot.lane.b32.xlu0 %v846, 96
    %v854 = vpop.permute.xlu0 %853
    %861 = vrot.lane.b32.xlu0 %v744, 112
    %v862 = vpop.permute.xlu0 %861
    %863 = vrot.lane.b32.xlu0 %v745, 112
    %v864 = vpop.permute.xlu0 %863
    %865 = vrot.lane.b32.xlu0 %v752, 112
    %v866 = vpop.permute.xlu0 %865
    %867 = vrot.lane.b32.xlu0 %v753, 112
    %v868 = vpop.permute.xlu0 %867
    %v873 = vrot.slane %v745, 1
    %v874 = vrot.slane %v753, 1
    %v879 = vrot.slane %v745, 2
    %v880 = vrot.slane %v753, 2
    %881 = vrot.lane.b32.xlu0 %v780, 16
    %v882 = vpop.permute.xlu0 %881
    %883 = vrot.lane.b32.xlu0 %v879, 16
    %v884 = vpop.permute.xlu0 %883
    %885 = vrot.lane.b32.xlu0 %v782, 16
    %v886 = vpop.permute.xlu0 %885
    %887 = vrot.lane.b32.xlu0 %v880, 16
    %v888 = vpop.permute.xlu0 %887
    %v893 = vrot.slane %v745, 3
    %v894 = vrot.slane %v753, 3
    %895 = vrot.lane.b32.xlu0 %v796, 32
    %v896 = vpop.permute.xlu0 %895
    %897 = vrot.lane.b32.xlu0 %v893, 32
    %v898 = vpop.permute.xlu0 %897
    %899 = vrot.lane.b32.xlu0 %v798, 32
    %v900 = vpop.permute.xlu0 %899
    %901 = vrot.lane.b32.xlu0 %v894, 32
    %v902 = vpop.permute.xlu0 %901
    %v907 = vrot.slane %v745, 4
    %v908 = vrot.slane %v753, 4
    %909 = vrot.lane.b32.xlu0 %v812, 48
    %v910 = vpop.permute.xlu0 %909
    %911 = vrot.lane.b32.xlu0 %v907, 48
    %v912 = vpop.permute.xlu0 %911
    %913 = vrot.lane.b32.xlu0 %v814, 48
    %v914 = vpop.permute.xlu0 %913
    %915 = vrot.lane.b32.xlu0 %v908, 48
    %v916 = vpop.permute.xlu0 %915
    %v921 = vrot.slane %v745, 5
    %v922 = vrot.slane %v753, 5
    %923 = vrot.lane.b32.xlu0 %v828, 64
    %v924 = vpop.permute.xlu0 %923
    %925 = vrot.lane.b32.xlu0 %v921, 64
    %v926 = vpop.permute.xlu0 %925
    %927 = vrot.lane.b32.xlu0 %v830, 64
    %v928 = vpop.permute.xlu0 %927
    %929 = vrot.lane.b32.xlu0 %v922, 64
    %v930 = vpop.permute.xlu0 %929
    %v935 = vrot.slane %v745, 6
    %v936 = vrot.slane %v753, 6
    %937 = vrot.lane.b32.xlu0 %v844, 80
    %v938 = vpop.permute.xlu0 %937
    %939 = vrot.lane.b32.xlu0 %v935, 80
    %v940 = vpop.permute.xlu0 %939
    %941 = vrot.lane.b32.xlu0 %v846, 80
    %v942 = vpop.permute.xlu0 %941
    %943 = vrot.lane.b32.xlu0 %v936, 80
    %v944 = vpop.permute.xlu0 %943
    %951 = vrot.lane.b32.xlu0 %v745, 96
    %v952 = vpop.permute.xlu0 %951
    %953 = vrot.lane.b32.xlu0 %v746, 96
    %v954 = vpop.permute.xlu0 %953
    %955 = vrot.lane.b32.xlu0 %v753, 96
    %v956 = vpop.permute.xlu0 %955
    %957 = vrot.lane.b32.xlu0 %v754, 96
    %v958 = vpop.permute.xlu0 %957
    %v963 = vrot.slane %v746, 1
    %v964 = vrot.slane %v754, 1
    %965 = vrot.lane.b32.xlu0 %v873, 112
    %v966 = vpop.permute.xlu0 %965
    %967 = vrot.lane.b32.xlu0 %v963, 112
    %v968 = vpop.permute.xlu0 %967
    %969 = vrot.lane.b32.xlu0 %v874, 112
    %v970 = vpop.permute.xlu0 %969
    %971 = vrot.lane.b32.xlu0 %v964, 112
    %v972 = vpop.permute.xlu0 %971
    %vm977 = vcmask 130048
    %v978 = vsel %vm977, %v743, %v768
    %v979 = vsel %vm977, %v744, %v770
    %v980 = vsel %vm977, %v751, %v772
    %v981 = vsel %vm977, %v752, %v774
    %vm982 = vcmask 261120
    %v983 = vsel %vm982, %v978, %v784
    %v984 = vsel %vm982, %v979, %v786
    %v985 = vsel %vm982, %v980, %v788
    %v986 = vsel %vm982, %v981, %v790
    %vm987 = vcmask 392192
    %v988 = vsel %vm987, %v983, %v800
    %v989 = vsel %vm987, %v984, %v802
    %v990 = vsel %vm987, %v985, %v804
    %v991 = vsel %vm987, %v986, %v806
    %vm992 = vcmask 523264
    %v993 = vsel %vm992, %v988, %v816
    %v994 = vsel %vm992, %v989, %v818
    %v995 = vsel %vm992, %v990, %v820
    %v996 = vsel %vm992, %v991, %v822
    %vm997 = vcmask 654336
    %v998 = vsel %vm997, %v993, %v832
    %v999 = vsel %vm997, %v994, %v834
    %v1000 = vsel %vm997, %v995, %v836
    %v1001 = vsel %vm997, %v996, %v838
    %vm1002 = vcmask 785408
    %v1003 = vsel %vm1002, %v998, %v848
    %v1004 = vsel %vm1002, %v999, %v850
    %v1005 = vsel %vm1002, %v1000, %v852
    %v1006 = vsel %vm1002, %v1001, %v854
    %vm1007 = vcmask 916480
    %v1008 = vsel %vm1007, %v1003, %v862
    %v1009 = vsel %vm1007, %v1004, %v864
    %v1010 = vsel %vm1007, %v1005, %v866
    %v1011 = vsel %vm1007, %v1006, %v868
    %v1012 = vsel %vm977, %v764, %v882
    %v1013 = vsel %vm977, %v873, %v884
    %v1014 = vsel %vm977, %v766, %v886
    %v1015 = vsel %vm977, %v874, %v888
    %v1016 = vsel %vm982, %v1012, %v896
    %v1017 = vsel %vm982, %v1013, %v898
    %v1018 = vsel %vm982, %v1014, %v900
    %v1019 = vsel %vm982, %v1015, %v902
    %v1020 = vsel %vm987, %v1016, %v910
    %v1021 = vsel %vm987, %v1017, %v912
    %v1022 = vsel %vm987, %v1018, %v914
    %v1023 = vsel %vm987, %v1019, %v916
    %v1024 = vsel %vm992, %v1020, %v924
    %v1025 = vsel %vm992, %v1021, %v926
    %v1026 = vsel %vm992, %v1022, %v928
    %v1027 = vsel %vm992, %v1023, %v930
    %v1028 = vsel %vm997, %v1024, %v938
    %v1029 = vsel %vm997, %v1025, %v940
    %v1030 = vsel %vm997, %v1026, %v942
    %v1031 = vsel %vm997, %v1027, %v944
    %v1032 = vsel %vm1002, %v1028, %v952
    %v1033 = vsel %vm1002, %v1029, %v954
    %v1034 = vsel %vm1002, %v1030, %v956
    %v1035 = vsel %vm1002, %v1031, %v958
    %v1036 = vsel %vm1007, %v1032, %v966
    %v1037 = vsel %vm1007, %v1033, %v968
    %v1038 = vsel %vm1007, %v1034, %v970
    %v1039 = vsel %vm1007, %v1035, %v972
    %1040 = vrot.lane.b32.xlu0 %v873, 16
    %v1041 = vpop.permute.xlu0 %1040
    %1042 = vrot.lane.b32.xlu0 %v963, 16
    %v1043 = vpop.permute.xlu0 %1042
    %1044 = vrot.lane.b32.xlu0 %v874, 16
    %v1045 = vpop.permute.xlu0 %1044
    %1046 = vrot.lane.b32.xlu0 %v964, 16
    %v1047 = vpop.permute.xlu0 %1046
    %v1052 = vrot.slane %v746, 2
    %v1053 = vrot.slane %v754, 2
    %1054 = vrot.lane.b32.xlu0 %v879, 32
    %v1055 = vpop.permute.xlu0 %1054
    %1056 = vrot.lane.b32.xlu0 %v1052, 32
    %v1057 = vpop.permute.xlu0 %1056
    %1058 = vrot.lane.b32.xlu0 %v880, 32
    %v1059 = vpop.permute.xlu0 %1058
    %1060 = vrot.lane.b32.xlu0 %v1053, 32
    %v1061 = vpop.permute.xlu0 %1060
    %v1066 = vrot.slane %v746, 3
    %v1067 = vrot.slane %v754, 3
    %1068 = vrot.lane.b32.xlu0 %v893, 48
    %v1069 = vpop.permute.xlu0 %1068
    %1070 = vrot.lane.b32.xlu0 %v1066, 48
    %v1071 = vpop.permute.xlu0 %1070
    %1072 = vrot.lane.b32.xlu0 %v894, 48
    %v1073 = vpop.permute.xlu0 %1072
    %1074 = vrot.lane.b32.xlu0 %v1067, 48
    %v1075 = vpop.permute.xlu0 %1074
    %v1080 = vrot.slane %v746, 4
    %v1081 = vrot.slane %v754, 4
    %1082 = vrot.lane.b32.xlu0 %v907, 64
    %v1083 = vpop.permute.xlu0 %1082
    %1084 = vrot.lane.b32.xlu0 %v1080, 64
    %v1085 = vpop.permute.xlu0 %1084
    %1086 = vrot.lane.b32.xlu0 %v908, 64
    %v1087 = vpop.permute.xlu0 %1086
    %1088 = vrot.lane.b32.xlu0 %v1081, 64
    %v1089 = vpop.permute.xlu0 %1088
    %v1096 = vrot.slane %v746, 6
    %v1097 = vrot.slane %v747, 6
    %v1098 = vrot.slane %v754, 6
    %v1099 = vrot.slane %v755, 6
    %1100 = vrot.lane.b32.xlu0 %v1096, 80
    %v1101 = vpop.permute.xlu0 %1100
    %1102 = vrot.lane.b32.xlu0 %v1097, 80
    %v1103 = vpop.permute.xlu0 %1102
    %1104 = vrot.lane.b32.xlu0 %v1098, 80
    %v1105 = vpop.permute.xlu0 %1104
    %1106 = vrot.lane.b32.xlu0 %v1099, 80
    %v1107 = vpop.permute.xlu0 %1106
    %v1112 = vrot.slane %v746, 7
    %v1113 = vrot.slane %v747, 7
    %v1114 = vrot.slane %v754, 7
    %v1115 = vrot.slane %v755, 7
    %1116 = vrot.lane.b32.xlu0 %v1112, 96
    %v1117 = vpop.permute.xlu0 %1116
    %1118 = vrot.lane.b32.xlu0 %v1113, 96
    %v1119 = vpop.permute.xlu0 %1118
    %1120 = vrot.lane.b32.xlu0 %v1114, 96
    %v1121 = vpop.permute.xlu0 %1120
    %1122 = vrot.lane.b32.xlu0 %v1115, 96
    %v1123 = vpop.permute.xlu0 %1122
    %1128 = vrot.lane.b32.xlu0 %v746, 112
    %v1129 = vpop.permute.xlu0 %1128
    %1130 = vrot.lane.b32.xlu0 %v747, 112
    %v1131 = vpop.permute.xlu0 %1130
    %1132 = vrot.lane.b32.xlu0 %v754, 112
    %v1133 = vpop.permute.xlu0 %1132
    %1134 = vrot.lane.b32.xlu0 %v755, 112
    %v1135 = vpop.permute.xlu0 %1134
    %v1140 = vrot.slane %v747, 1
    %v1141 = vrot.slane %v755, 1
    %v1146 = vrot.slane %v747, 2
    %v1147 = vrot.slane %v755, 2
    %1148 = vrot.lane.b32.xlu0 %v1052, 16
    %v1149 = vpop.permute.xlu0 %1148
    %1150 = vrot.lane.b32.xlu0 %v1146, 16
    %v1151 = vpop.permute.xlu0 %1150
    %1152 = vrot.lane.b32.xlu0 %v1053, 16
    %v1153 = vpop.permute.xlu0 %1152
    %1154 = vrot.lane.b32.xlu0 %v1147, 16
    %v1155 = vpop.permute.xlu0 %1154
    %v1160 = vrot.slane %v747, 3
    %v1161 = vrot.slane %v755, 3
    %1162 = vrot.lane.b32.xlu0 %v1066, 32
    %v1163 = vpop.permute.xlu0 %1162
    %1164 = vrot.lane.b32.xlu0 %v1160, 32
    %v1165 = vpop.permute.xlu0 %1164
    %1166 = vrot.lane.b32.xlu0 %v1067, 32
    %v1167 = vpop.permute.xlu0 %1166
    %1168 = vrot.lane.b32.xlu0 %v1161, 32
    %v1169 = vpop.permute.xlu0 %1168
    %v1174 = vrot.slane %v747, 4
    %v1175 = vrot.slane %v755, 4
    %1176 = vrot.lane.b32.xlu0 %v1080, 48
    %v1177 = vpop.permute.xlu0 %1176
    %1178 = vrot.lane.b32.xlu0 %v1174, 48
    %v1179 = vpop.permute.xlu0 %1178
    %1180 = vrot.lane.b32.xlu0 %v1081, 48
    %v1181 = vpop.permute.xlu0 %1180
    %1182 = vrot.lane.b32.xlu0 %v1175, 48
    %v1183 = vpop.permute.xlu0 %1182
    %v1190 = vrot.slane %v748, 6
    %v1191 = vrot.slane %v756, 6
    %1192 = vrot.lane.b32.xlu0 %v1097, 64
    %v1193 = vpop.permute.xlu0 %1192
    %1194 = vrot.lane.b32.xlu0 %v1190, 64
    %v1195 = vpop.permute.xlu0 %1194
    %1196 = vrot.lane.b32.xlu0 %v1099, 64
    %v1197 = vpop.permute.xlu0 %1196
    %1198 = vrot.lane.b32.xlu0 %v1191, 64
    %v1199 = vpop.permute.xlu0 %1198
    %v1204 = vrot.slane %v748, 7
    %v1205 = vrot.slane %v756, 7
    %1206 = vrot.lane.b32.xlu0 %v1113, 80
    %v1207 = vpop.permute.xlu0 %1206
    %1208 = vrot.lane.b32.xlu0 %v1204, 80
    %v1209 = vpop.permute.xlu0 %1208
    %1210 = vrot.lane.b32.xlu0 %v1115, 80
    %v1211 = vpop.permute.xlu0 %1210
    %1212 = vrot.lane.b32.xlu0 %v1205, 80
    %v1213 = vpop.permute.xlu0 %1212
    %1218 = vrot.lane.b32.xlu0 %v747, 96
    %v1219 = vpop.permute.xlu0 %1218
    %1220 = vrot.lane.b32.xlu0 %v748, 96
    %v1221 = vpop.permute.xlu0 %1220
    %1222 = vrot.lane.b32.xlu0 %v755, 96
    %v1223 = vpop.permute.xlu0 %1222
    %1224 = vrot.lane.b32.xlu0 %v756, 96
    %v1225 = vpop.permute.xlu0 %1224
    %v1230 = vrot.slane %v748, 1
    %v1231 = vrot.slane %v756, 1
    %1232 = vrot.lane.b32.xlu0 %v1140, 112
    %v1233 = vpop.permute.xlu0 %1232
    %1234 = vrot.lane.b32.xlu0 %v1230, 112
    %v1235 = vpop.permute.xlu0 %1234
    %1236 = vrot.lane.b32.xlu0 %v1141, 112
    %v1237 = vpop.permute.xlu0 %1236
    %1238 = vrot.lane.b32.xlu0 %v1231, 112
    %v1239 = vpop.permute.xlu0 %1238
    %v1244 = vsel %vm977, %v745, %v1041
    %v1245 = vsel %vm977, %v746, %v1043
    %v1246 = vsel %vm977, %v753, %v1045
    %v1247 = vsel %vm977, %v754, %v1047
    %v1248 = vsel %vm982, %v1244, %v1055
    %v1249 = vsel %vm982, %v1245, %v1057
    %v1250 = vsel %vm982, %v1246, %v1059
    %v1251 = vsel %vm982, %v1247, %v1061
    %v1252 = vsel %vm987, %v1248, %v1069
    %v1253 = vsel %vm987, %v1249, %v1071
    %v1254 = vsel %vm987, %v1250, %v1073
    %v1255 = vsel %vm987, %v1251, %v1075
    %v1256 = vsel %vm992, %v1252, %v1083
    %v1257 = vsel %vm992, %v1253, %v1085
    %v1258 = vsel %vm992, %v1254, %v1087
    %v1259 = vsel %vm992, %v1255, %v1089
    %v1260 = vsel %vm997, %v1256, %v1101
    %v1261 = vsel %vm997, %v1257, %v1103
    %v1262 = vsel %vm997, %v1258, %v1105
    %v1263 = vsel %vm997, %v1259, %v1107
    %v1264 = vsel %vm1002, %v1260, %v1117
    %v1265 = vsel %vm1002, %v1261, %v1119
    %v1266 = vsel %vm1002, %v1262, %v1121
    %v1267 = vsel %vm1002, %v1263, %v1123
    %v1268 = vsel %vm1007, %v1264, %v1129
    %v1269 = vsel %vm1007, %v1265, %v1131
    %v1270 = vsel %vm1007, %v1266, %v1133
    %v1271 = vsel %vm1007, %v1267, %v1135
    %v1272 = vsel %vm977, %v963, %v1149
    %v1273 = vsel %vm977, %v1140, %v1151
    %v1274 = vsel %vm977, %v964, %v1153
    %v1275 = vsel %vm977, %v1141, %v1155
    %v1276 = vsel %vm982, %v1272, %v1163
    %v1277 = vsel %vm982, %v1273, %v1165
    %v1278 = vsel %vm982, %v1274, %v1167
    %v1279 = vsel %vm982, %v1275, %v1169
    %v1280 = vsel %vm987, %v1276, %v1177
    %v1281 = vsel %vm987, %v1277, %v1179
    %v1282 = vsel %vm987, %v1278, %v1181
    %v1283 = vsel %vm987, %v1279, %v1183
    %v1284 = vsel %vm992, %v1280, %v1193
    %v1285 = vsel %vm992, %v1281, %v1195
    %v1286 = vsel %vm992, %v1282, %v1197
    %v1287 = vsel %vm992, %v1283, %v1199
    %v1288 = vsel %vm997, %v1284, %v1207
    %v1289 = vsel %vm997, %v1285, %v1209
    %v1290 = vsel %vm997, %v1286, %v1211
    %v1291 = vsel %vm997, %v1287, %v1213
    %v1292 = vsel %vm1002, %v1288, %v1219
    %v1293 = vsel %vm1002, %v1289, %v1221
    %v1294 = vsel %vm1002, %v1290, %v1223
    %v1295 = vsel %vm1002, %v1291, %v1225
    %v1296 = vsel %vm1007, %v1292, %v1233
    %v1297 = vsel %vm1007, %v1293, %v1235
    %v1298 = vsel %vm1007, %v1294, %v1237
    %v1299 = vsel %vm1007, %v1295, %v1239
    %1300 = vrot.lane.b32.xlu0 %v1140, 16
    %v1301 = vpop.permute.xlu0 %1300
    %1302 = vrot.lane.b32.xlu0 %v1230, 16
    %v1303 = vpop.permute.xlu0 %1302
    %1304 = vrot.lane.b32.xlu0 %v1141, 16
    %v1305 = vpop.permute.xlu0 %1304
    %1306 = vrot.lane.b32.xlu0 %v1231, 16
    %v1307 = vpop.permute.xlu0 %1306
    %v1312 = vrot.slane %v748, 2
    %v1313 = vrot.slane %v756, 2
    %1314 = vrot.lane.b32.xlu0 %v1146, 32
    %v1315 = vpop.permute.xlu0 %1314
    %1316 = vrot.lane.b32.xlu0 %v1312, 32
    %v1317 = vpop.permute.xlu0 %1316
    %1318 = vrot.lane.b32.xlu0 %v1147, 32
    %v1319 = vpop.permute.xlu0 %1318
    %1320 = vrot.lane.b32.xlu0 %v1313, 32
    %v1321 = vpop.permute.xlu0 %1320
    %v1328 = vrot.slane %v748, 4
    %v1329 = vrot.slane %v749, 4
    %v1330 = vrot.slane %v756, 4
    %v1331 = vrot.slane %v757, 4
    %1332 = vrot.lane.b32.xlu0 %v1328, 48
    %v1333 = vpop.permute.xlu0 %1332
    %1334 = vrot.lane.b32.xlu0 %v1329, 48
    %v1335 = vpop.permute.xlu0 %1334
    %1336 = vrot.lane.b32.xlu0 %v1330, 48
    %v1337 = vpop.permute.xlu0 %1336
    %1338 = vrot.lane.b32.xlu0 %v1331, 48
    %v1339 = vpop.permute.xlu0 %1338
    %v1344 = vrot.slane %v748, 5
    %v1345 = vrot.slane %v749, 5
    %v1346 = vrot.slane %v756, 5
    %v1347 = vrot.slane %v757, 5
    %1348 = vrot.lane.b32.xlu0 %v1344, 64
    %v1349 = vpop.permute.xlu0 %1348
    %1350 = vrot.lane.b32.xlu0 %v1345, 64
    %v1351 = vpop.permute.xlu0 %1350
    %1352 = vrot.lane.b32.xlu0 %v1346, 64
    %v1353 = vpop.permute.xlu0 %1352
    %1354 = vrot.lane.b32.xlu0 %v1347, 64
    %v1355 = vpop.permute.xlu0 %1354
    %v1360 = vrot.slane %v749, 6
    %v1361 = vrot.slane %v757, 6
    %1362 = vrot.lane.b32.xlu0 %v1190, 80
    %v1363 = vpop.permute.xlu0 %1362
    %1364 = vrot.lane.b32.xlu0 %v1360, 80
    %v1365 = vpop.permute.xlu0 %1364
    %1366 = vrot.lane.b32.xlu0 %v1191, 80
    %v1367 = vpop.permute.xlu0 %1366
    %1368 = vrot.lane.b32.xlu0 %v1361, 80
    %v1369 = vpop.permute.xlu0 %1368
    %v1374 = vrot.slane %v749, 7
    %v1375 = vrot.slane %v757, 7
    %1376 = vrot.lane.b32.xlu0 %v1204, 96
    %v1377 = vpop.permute.xlu0 %1376
    %1378 = vrot.lane.b32.xlu0 %v1374, 96
    %v1379 = vpop.permute.xlu0 %1378
    %1380 = vrot.lane.b32.xlu0 %v1205, 96
    %v1381 = vpop.permute.xlu0 %1380
    %1382 = vrot.lane.b32.xlu0 %v1375, 96
    %v1383 = vpop.permute.xlu0 %1382
    %1388 = vrot.lane.b32.xlu0 %v748, 112
    %v1389 = vpop.permute.xlu0 %1388
    %1390 = vrot.lane.b32.xlu0 %v749, 112
    %v1391 = vpop.permute.xlu0 %1390
    %1392 = vrot.lane.b32.xlu0 %v756, 112
    %v1393 = vpop.permute.xlu0 %1392
    %1394 = vrot.lane.b32.xlu0 %v757, 112
    %v1395 = vpop.permute.xlu0 %1394
    %v1400 = vrot.slane %v749, 1
    %v1401 = vrot.slane %v757, 1
    %v1406 = vrot.slane %v749, 2
    %v1407 = vrot.slane %v757, 2
    %1408 = vrot.lane.b32.xlu0 %v1312, 16
    %v1409 = vpop.permute.xlu0 %1408
    %1410 = vrot.lane.b32.xlu0 %v1406, 16
    %v1411 = vpop.permute.xlu0 %1410
    %1412 = vrot.lane.b32.xlu0 %v1313, 16
    %v1413 = vpop.permute.xlu0 %1412
    %1414 = vrot.lane.b32.xlu0 %v1407, 16
    %v1415 = vpop.permute.xlu0 %1414
    %v1422 = vrot.slane %v750, 4
    %v1423 = vrot.slane %v758, 4
    %1424 = vrot.lane.b32.xlu0 %v1329, 32
    %v1425 = vpop.permute.xlu0 %1424
    %1426 = vrot.lane.b32.xlu0 %v1422, 32
    %v1427 = vpop.permute.xlu0 %1426
    %1428 = vrot.lane.b32.xlu0 %v1331, 32
    %v1429 = vpop.permute.xlu0 %1428
    %1430 = vrot.lane.b32.xlu0 %v1423, 32
    %v1431 = vpop.permute.xlu0 %1430
    %v1436 = vrot.slane %v750, 5
    %v1437 = vrot.slane %v758, 5
    %1438 = vrot.lane.b32.xlu0 %v1345, 48
    %v1439 = vpop.permute.xlu0 %1438
    %1440 = vrot.lane.b32.xlu0 %v1436, 48
    %v1441 = vpop.permute.xlu0 %1440
    %1442 = vrot.lane.b32.xlu0 %v1347, 48
    %v1443 = vpop.permute.xlu0 %1442
    %1444 = vrot.lane.b32.xlu0 %v1437, 48
    %v1445 = vpop.permute.xlu0 %1444
    %v1450 = vrot.slane %v750, 6
    %v1451 = vrot.slane %v758, 6
    %1452 = vrot.lane.b32.xlu0 %v1360, 64
    %v1453 = vpop.permute.xlu0 %1452
    %1454 = vrot.lane.b32.xlu0 %v1450, 64
    %v1455 = vpop.permute.xlu0 %1454
    %1456 = vrot.lane.b32.xlu0 %v1361, 64
    %v1457 = vpop.permute.xlu0 %1456
    %1458 = vrot.lane.b32.xlu0 %v1451, 64
    %v1459 = vpop.permute.xlu0 %1458
    %v1464 = vrot.slane %v750, 7
    %v1465 = vrot.slane %v758, 7
    %1466 = vrot.lane.b32.xlu0 %v1374, 80
    %v1467 = vpop.permute.xlu0 %1466
    %1468 = vrot.lane.b32.xlu0 %v1464, 80
    %v1469 = vpop.permute.xlu0 %1468
    %1470 = vrot.lane.b32.xlu0 %v1375, 80
    %v1471 = vpop.permute.xlu0 %1470
    %1472 = vrot.lane.b32.xlu0 %v1465, 80
    %v1473 = vpop.permute.xlu0 %1472
    %1478 = vrot.lane.b32.xlu0 %v749, 96
    %v1479 = vpop.permute.xlu0 %1478
    %1480 = vrot.lane.b32.xlu0 %v750, 96
    %v1481 = vpop.permute.xlu0 %1480
    %1482 = vrot.lane.b32.xlu0 %v757, 96
    %v1483 = vpop.permute.xlu0 %1482
    %1484 = vrot.lane.b32.xlu0 %v758, 96
    %v1485 = vpop.permute.xlu0 %1484
    %v1490 = vrot.slane %v750, 1
    %v1491 = vrot.slane %v758, 1
    %1492 = vrot.lane.b32.xlu0 %v1400, 112
    %v1493 = vpop.permute.xlu0 %1492
    %1494 = vrot.lane.b32.xlu0 %v1490, 112
    %v1495 = vpop.permute.xlu0 %1494
    %1496 = vrot.lane.b32.xlu0 %v1401, 112
    %v1497 = vpop.permute.xlu0 %1496
    %1498 = vrot.lane.b32.xlu0 %v1491, 112
    %v1499 = vpop.permute.xlu0 %1498
    %v1504 = vsel %vm977, %v747, %v1301
    %v1505 = vsel %vm977, %v748, %v1303
    %v1506 = vsel %vm977, %v755, %v1305
    %v1507 = vsel %vm977, %v756, %v1307
    %v1508 = vsel %vm982, %v1504, %v1315
    %v1509 = vsel %vm982, %v1505, %v1317
    %v1510 = vsel %vm982, %v1506, %v1319
    %v1511 = vsel %vm982, %v1507, %v1321
    %v1512 = vsel %vm987, %v1508, %v1333
    %v1513 = vsel %vm987, %v1509, %v1335
    %v1514 = vsel %vm987, %v1510, %v1337
    %v1515 = vsel %vm987, %v1511, %v1339
    %v1516 = vsel %vm992, %v1512, %v1349
    %v1517 = vsel %vm992, %v1513, %v1351
    %v1518 = vsel %vm992, %v1514, %v1353
    %v1519 = vsel %vm992, %v1515, %v1355
    %v1520 = vsel %vm997, %v1516, %v1363
    %v1521 = vsel %vm997, %v1517, %v1365
    %v1522 = vsel %vm997, %v1518, %v1367
    %v1523 = vsel %vm997, %v1519, %v1369
    %v1524 = vsel %vm1002, %v1520, %v1377
    %v1525 = vsel %vm1002, %v1521, %v1379
    %v1526 = vsel %vm1002, %v1522, %v1381
    %v1527 = vsel %vm1002, %v1523, %v1383
    %v1528 = vsel %vm1007, %v1524, %v1389
    %v1529 = vsel %vm1007, %v1525, %v1391
    %v1530 = vsel %vm1007, %v1526, %v1393
    %v1531 = vsel %vm1007, %v1527, %v1395
    %v1532 = vsel %vm977, %v1230, %v1409
    %v1533 = vsel %vm977, %v1400, %v1411
    %v1534 = vsel %vm977, %v1231, %v1413
    %v1535 = vsel %vm977, %v1401, %v1415
    %v1536 = vsel %vm982, %v1532, %v1425
    %v1537 = vsel %vm982, %v1533, %v1427
    %v1538 = vsel %vm982, %v1534, %v1429
    %v1539 = vsel %vm982, %v1535, %v1431
    %v1540 = vsel %vm987, %v1536, %v1439
    %v1541 = vsel %vm987, %v1537, %v1441
    %v1542 = vsel %vm987, %v1538, %v1443
    %v1543 = vsel %vm987, %v1539, %v1445
    %v1544 = vsel %vm992, %v1540, %v1453
    %v1545 = vsel %vm992, %v1541, %v1455
    %v1546 = vsel %vm992, %v1542, %v1457
    %v1547 = vsel %vm992, %v1543, %v1459
    %v1548 = vsel %vm997, %v1544, %v1467
    %v1549 = vsel %vm997, %v1545, %v1469
    %v1550 = vsel %vm997, %v1546, %v1471
    %v1551 = vsel %vm997, %v1547, %v1473
    %v1552 = vsel %vm1002, %v1548, %v1479
    %v1553 = vsel %vm1002, %v1549, %v1481
    %v1554 = vsel %vm1002, %v1550, %v1483
    %v1555 = vsel %vm1002, %v1551, %v1485
    %v1556 = vsel %vm1007, %v1552, %v1493
    %v1557 = vsel %vm1007, %v1553, %v1495
    %v1558 = vsel %vm1007, %v1554, %v1497
    %v1559 = vsel %vm1007, %v1555, %v1499
    %v1568 = vrot.slane %v1268, 2
    %v1569 = vrot.slane %v1296, 2
    %v1570 = vrot.slane %v1269, 2
    %v1571 = vrot.slane %v1297, 2
    %v1572 = vrot.slane %v1270, 2
    %v1573 = vrot.slane %v1298, 2
    %v1574 = vrot.slane %v1271, 2
    %v1575 = vrot.slane %v1299, 2
    %v1584 = vrot.slane %v1528, 4
    %v1585 = vrot.slane %v1556, 4
    %v1586 = vrot.slane %v1529, 4
    %v1587 = vrot.slane %v1557, 4
    %v1588 = vrot.slane %v1530, 4
    %v1589 = vrot.slane %v1558, 4
    %v1590 = vrot.slane %v1531, 4
    %v1591 = vrot.slane %v1559, 4
    %v1596 = vrot.slane %v1010, 7
    %vm1597 = vcmask 1041409
    %v1598 = vsel %vm1597, %v1596, %v1008
    %v1599 = vrot.slane %v1038, 7
    %v1600 = vsel %vm1597, %v1599, %v1036
    %v1601 = vrot.slane %v1572, 7
    %v1602 = vsel %vm1597, %v1601, %v1568
    %v1603 = vrot.slane %v1573, 7
    %v1604 = vsel %vm1597, %v1603, %v1569
    %v1605 = vrot.slane %v1588, 7
    %v1606 = vsel %vm1597, %v1605, %v1584
    %v1607 = vrot.slane %v1589, 7
    %v1608 = vsel %vm1597, %v1607, %v1585
    %v1609 = vrot.slane %v1361, 7
    %v1610 = vsel %vm1597, %v1609, %v1360
    %v1618 = vrot.slane %v1008, 7
    %v1619 = vrot.slane %v1010, 6
    %vm1620 = vcmask 1043459
    %v1621 = vsel %vm1620, %v1619, %v1618
    %v1622 = vrot.slane %v1036, 7
    %v1623 = vrot.slane %v1038, 6
    %v1624 = vsel %vm1620, %v1623, %v1622
    %v1625 = vrot.slane %v1568, 7
    %v1626 = vrot.slane %v1572, 6
    %v1627 = vsel %vm1620, %v1626, %v1625
    %v1628 = vrot.slane %v1569, 7
    %v1629 = vrot.slane %v1573, 6
    %v1630 = vsel %vm1620, %v1629, %v1628
    %v1631 = vrot.slane %v1584, 7
    %v1632 = vrot.slane %v1588, 6
    %v1633 = vsel %vm1620, %v1632, %v1631
    %v1634 = vrot.slane %v1585, 7
    %v1635 = vrot.slane %v1589, 6
    %v1636 = vsel %vm1620, %v1635, %v1634
    %v1637 = vrot.slane %v1360, 7
    %v1638 = vrot.slane %v1361, 6
    %v1639 = vsel %vm1620, %v1638, %v1637
    %v1651 = vrot.slane %v1009, 4
    %v1652 = vrot.slane %v1011, 3
    %vm1653 = vcmask 1045509
    %v1654 = vsel %vm1653, %v1652, %v1651
    %v1655 = vrot.slane %v1037, 4
    %v1656 = vrot.slane %v1039, 3
    %v1657 = vsel %vm1653, %v1656, %v1655
    %v1658 = vrot.slane %v1570, 4
    %v1659 = vrot.slane %v1574, 3
    %v1660 = vsel %vm1653, %v1659, %v1658
    %v1661 = vrot.slane %v1571, 4
    %v1662 = vrot.slane %v1575, 3
    %v1663 = vsel %vm1653, %v1662, %v1661
    %v1664 = vrot.slane %v1586, 4
    %v1665 = vrot.slane %v1590, 3
    %v1666 = vsel %vm1653, %v1665, %v1664
    %v1667 = vrot.slane %v1587, 4
    %v1668 = vrot.slane %v1591, 3
    %v1669 = vsel %vm1653, %v1668, %v1667
    %v1670 = vrot.slane %v1450, 4
    %v1671 = vrot.slane %v1451, 3
    %v1672 = vsel %vm1653, %v1671, %v1670
    %v1680 = vrot.slane %v1009, 3
    %v1681 = vrot.slane %v1011, 2
    %vm1682 = vcmask 1047559
    %v1683 = vsel %vm1682, %v1681, %v1680
    %v1684 = vrot.slane %v1037, 3
    %v1685 = vrot.slane %v1039, 2
    %v1686 = vsel %vm1682, %v1685, %v1684
    %v1687 = vrot.slane %v1570, 3
    %v1688 = vrot.slane %v1574, 2
    %v1689 = vsel %vm1682, %v1688, %v1687
    %v1690 = vrot.slane %v1571, 3
    %v1691 = vrot.slane %v1575, 2
    %v1692 = vsel %vm1682, %v1691, %v1690
    %v1693 = vrot.slane %v1586, 3
    %v1694 = vrot.slane %v1590, 2
    %v1695 = vsel %vm1682, %v1694, %v1693
    %v1696 = vrot.slane %v1587, 3
    %v1697 = vrot.slane %v1591, 2
    %v1698 = vsel %vm1682, %v1697, %v1696
    %v1699 = vrot.slane %v1450, 3
    %v1700 = vrot.slane %v1451, 2
    %v1701 = vsel %vm1682, %v1700, %v1699
    %vm1709 = vcmask 1041408
    %v1710 = vsel %vm1709, %v1598, %v1621
    %v1711 = vsel %vm1709, %v1600, %v1624
    %v1712 = vsel %vm1709, %v1602, %v1627
    %v1713 = vsel %vm1709, %v1604, %v1630
    %v1714 = vsel %vm1709, %v1606, %v1633
    %v1715 = vsel %vm1709, %v1608, %v1636
    %v1716 = vsel %vm1709, %v1610, %v1639
    %vm1717 = vcmask 1043456
    %v1718 = vsel %vm1717, %v1710, %v1654
    %v1719 = vsel %vm1717, %v1711, %v1657
    %v1720 = vsel %vm1717, %v1712, %v1660
    %v1721 = vsel %vm1717, %v1713, %v1663
    %v1722 = vsel %vm1717, %v1714, %v1666
    %v1723 = vsel %vm1717, %v1715, %v1669
    %v1724 = vsel %vm1717, %v1716, %v1672
    %vm1725 = vcmask 1045504
    %v1726 = vsel %vm1725, %v1718, %v1683
    %v1727 = vsel %vm1725, %v1719, %v1686
    %v1728 = vsel %vm1725, %v1720, %v1689
    %v1729 = vsel %vm1725, %v1721, %v1692
    %v1730 = vsel %vm1725, %v1722, %v1695
    %v1731 = vsel %vm1725, %v1723, %v1698
    %v1732 = vsel %vm1725, %v1724, %v1701
    %v1733 = vld [vmem:[%s2] sm:$0xff]
    %v1734 = vld [vmem:[%s2 + $0x8] sm:$0xff]
    %v1735 = vld [vmem:[%s2 + $0x10] sm:$0xff]
    %v1736 = vld [vmem:[%s2 + $0x18] sm:$0xff]
    %v1737 = vld [vmem:[%s2 + $0x20] sm:$0xff]
    %v1738 = vld [vmem:[%s2 + $0x28] sm:$0xff]
    %v1739 = vld [vmem:[%s2 + $0x30] sm:$0xff]
    %v1740 = vld [vmem:[%s2 + $0x38] sm:$0xff]
    %v1741 = vld [vmem:[%s2 + $0x40] sm:$0xff]
    %v1742 = vld [vmem:[%s2 + $0x48] sm:$0xff]
    %v1743 = vld [vmem:[%s2 + $0x50] sm:$0xff]
    %v1744 = vld [vmem:[%s2 + $0x58] sm:$0xff]
    %v1745 = vld [vmem:[%s2 + $0x60] sm:$0xff]
    %v1746 = vld [vmem:[%s2 + $0x68] sm:$0xff]
    %v1747 = vld [vmem:[%s2 + $0x70] sm:$0xff]
    %v1748 = vld [vmem:[%s2 + $0x78] sm:$0xff]
    %v1749 = vld [vmem:[%s2 + $0x80] sm:$0xff]
    %v1750 = vld [vmem:[%s2 + $0x88] sm:$0xff]
    %v1751 = vld [vmem:[%s2 + $0x90] sm:$0xff]
    %v1752 = vld [vmem:[%s2 + $0x98] sm:$0xff]
    %v1753 = vld [vmem:[%s2 + $0xa0] sm:$0xff]
    %v1754 = vld [vmem:[%s2 + $0xa8] sm:$0xff]
    %v1755 = vld [vmem:[%s2 + $0xb0] sm:$0xff]
    %v1756 = vld [vmem:[%s2 + $0xb8] sm:$0xff]
    %v1757 = vld [vmem:[%s2 + $0xc0] sm:$0xff]
    %v1758 = vld [vmem:[%s2 + $0xc8] sm:$0xff]
    %v1759 = vld [vmem:[%s2 + $0xd0] sm:$0xff]
    %v1760 = vld [vmem:[%s2 + $0xd8] sm:$0xff]
    %v1761 = vld [vmem:[%s2 + $0xe0] sm:$0xff]
    %v1762 = vld [vmem:[%s2 + $0xe8] sm:$0xff]
    %v1763 = vld [vmem:[%s2 + $0xf0] sm:$0xff]
    %v1764 = vld [vmem:[%s2 + $0xf8] sm:$0xff]
    %v1765 = vld [vmem:[%s2 + $0x100] sm:$0xff]
    %v1766 = vld [vmem:[%s2 + $0x108] sm:$0xff]
    %v1767 = vld [vmem:[%s2 + $0x110] sm:$0xff]
    %v1768 = vld [vmem:[%s2 + $0x118] sm:$0xff]
    %v1769 = vld [vmem:[%s2 + $0x120] sm:$0xff]
    %v1770 = vld [vmem:[%s2 + $0x128] sm:$0xff]
    %v1771 = vld [vmem:[%s2 + $0x130] sm:$0xff]
    %v1772 = vld [vmem:[%s2 + $0x138] sm:$0xff]
    %v1773 = vld [vmem:[%s2 + $0x140] sm:$0xff]
    %v1774 = vld [vmem:[%s2 + $0x148] sm:$0xff]
    %v1775 = vld [vmem:[%s2 + $0x150] sm:$0xff]
    %v1776 = vld [vmem:[%s2 + $0x158] sm:$0xff]
    %v1777 = vld [vmem:[%s2 + $0x160] sm:$0xff]
    %v1778 = vld [vmem:[%s2 + $0x168] sm:$0xff]
    %v1779 = vld [vmem:[%s2 + $0x170] sm:$0xff]
    %v1780 = vld [vmem:[%s2 + $0x178] sm:$0xff]
    %v1781 = vld [vmem:[%s2 + $0x180] sm:$0xff]
    %v1782 = vld [vmem:[%s2 + $0x188] sm:$0xff]
    %v1783 = vld [vmem:[%s2 + $0x190] sm:$0xff]
    %v1784 = vld [vmem:[%s2 + $0x198] sm:$0xff]
    %v1785 = vld [vmem:[%s2 + $0x1a0] sm:$0xff]
    %v1786 = vld [vmem:[%s2 + $0x1a8] sm:$0xff]
    %v1787 = vld [vmem:[%s2 + $0x1b0] sm:$0xff]
    %v1788 = vld [vmem:[%s2 + $0x1b8] sm:$0xff]
    %v1789 = vld [vmem:[%s2 + $0x1c0] sm:$0xff]
    %v1790 = vld [vmem:[%s2 + $0x1c8] sm:$0xff]
    %v1791 = vld [vmem:[%s2 + $0x1d0] sm:$0xff]
    %v1792 = vld [vmem:[%s2 + $0x1d8] sm:$0xff]
    %v1793 = vld [vmem:[%s2 + $0x1e0] sm:$0xff]
    %v1794 = vld [vmem:[%s2 + $0x1e8] sm:$0xff]
    %v1795 = vld [vmem:[%s2 + $0x1f0] sm:$0xff]
    %v1796 = vld [vmem:[%s2 + $0x1f8] sm:$0xff]
    %v1797 = vld [vmem:[%s2 + $0x200] sm:$0xff]
    %v1798 = vld [vmem:[%s2 + $0x208] sm:$0xff]
    %v1799 = vld [vmem:[%s2 + $0x210] sm:$0xff]
    %v1800 = vld [vmem:[%s2 + $0x218] sm:$0xff]
    %v1801 = vld [vmem:[%s2 + $0x220] sm:$0xff]
    %v1802 = vld [vmem:[%s2 + $0x228] sm:$0xff]
    %v1803 = vld [vmem:[%s2 + $0x230] sm:$0xff]
    %v1804 = vld [vmem:[%s2 + $0x238] sm:$0xff]
    %v1805 = vld [vmem:[%s2 + $0x240] sm:$0xff]
    %v1806 = vld [vmem:[%s2 + $0x248] sm:$0xff]
    %v1807 = vld [vmem:[%s2 + $0x250] sm:$0xff]
    %v1808 = vld [vmem:[%s2 + $0x258] sm:$0xff]
    %v1809 = vld [vmem:[%s2 + $0x260] sm:$0xff]
    %v1810 = vld [vmem:[%s2 + $0x268] sm:$0xff]
    %v1811 = vld [vmem:[%s2 + $0x270] sm:$0xff]
    %v1812 = vld [vmem:[%s2 + $0x278] sm:$0xff]
    %v1813 = vld [vmem:[%s2 + $0x280] sm:$0xff]
    %v1814 = vld [vmem:[%s2 + $0x288] sm:$0xff]
    %v1815 = vld [vmem:[%s2 + $0x290] sm:$0xff]
    %v1816 = vld [vmem:[%s2 + $0x298] sm:$0xff]
    %v1817 = vld [vmem:[%s2 + $0x2a0] sm:$0xff]
    %v1818 = vld [vmem:[%s2 + $0x2a8] sm:$0xff]
    %v1819 = vld [vmem:[%s2 + $0x2b0] sm:$0xff]
    %v1820 = vld [vmem:[%s2 + $0x2b8] sm:$0xff]
    %v1821 = vld [vmem:[%s2 + $0x2c0] sm:$0xff]
    %v1822 = vld [vmem:[%s2 + $0x2c8] sm:$0xff]
    %v1823 = vld [vmem:[%s2 + $0x2d0] sm:$0xff]
    %v1824 = vld [vmem:[%s2 + $0x2d8] sm:$0xff]
    %v1825 = vld [vmem:[%s2 + $0x2e0] sm:$0xff]
    %v1826 = vld [vmem:[%s2 + $0x2e8] sm:$0xff]
    %v1827 = vld [vmem:[%s2 + $0x2f0] sm:$0xff]
    %v1828 = vld [vmem:[%s2 + $0x2f8] sm:$0xff]
    %v1829 = vld [vmem:[%s2 + $0x300] sm:$0xff]
    %v1830 = vld [vmem:[%s2 + $0x308] sm:$0xff]
    %v1832 = vsel %vm977, %v1732, 0
    %1834 = vmatprep.subr.mxu0 0.0
    %1835 = vmatpush1.msra.mxu0 %v1748
    %1836 = vmatprep.subr.mxu0 0.0
    %1837 = vmatpush1.msra.mxu0 %v1747
    %1838 = vmatprep.subr.mxu0 0.0
    %1839 = vmatpush1.msra.mxu0 %v1746
    %1840 = vmatprep.subr.mxu0 0.0
    %1841 = vmatpush1.msra.mxu0 %v1745
    %1842 = vmatprep.subr.mxu0 0.0
    %1843 = vmatpush1.msra.mxu0 %v1744
    %1844 = vmatprep.subr.mxu0 0.0
    %1845 = vmatpush1.msra.mxu0 %v1743
    %1846 = vmatprep.subr.mxu0 0.0
    %1847 = vmatpush1.msra.mxu0 %v1742
    %1848 = vmatprep.subr.mxu0 0.0
    %1849 = vmatpush1.msra.mxu0 %v1741
    %1850 = vmatprep.subr.mxu0 0.0
    %1851 = vmatpush1.msra.mxu0 %v1740
    %1852 = vmatprep.subr.mxu0 0.0
    %1853 = vmatpush1.msra.mxu0 %v1739
    %1854 = vmatprep.subr.mxu0 0.0
    %1855 = vmatpush1.msra.mxu0 %v1738
    %1856 = vmatprep.subr.mxu0 0.0
    %1857 = vmatpush1.msra.mxu0 %v1737
    %1858 = vmatprep.subr.mxu0 0.0
    %1859 = vmatpush1.msra.mxu0 %v1736
    %1860 = vmatprep.subr.mxu0 0.0
    %1861 = vmatpush1.msra.mxu0 %v1735
    %1862 = vmatprep.subr.mxu0 0.0
    %1863 = vmatpush1.msra.mxu0 %v1734
    %1864 = vmatprep.subr.mxu0 0.0
    %1865 = vmatpush1.msra.mxu0 %v1733
    %1866 = vmatprep.subr.mxu0 0.0
    %1867 = vmatpush2.msra.mxu0 %v1764
    %1868 = vmatprep.subr.mxu0 0.0
    %1869 = vmatpush2.msra.mxu0 %v1763
    %1870 = vmatprep.subr.mxu0 0.0
    %1871 = vmatpush2.msra.mxu0 %v1762
    %1872 = vmatprep.subr.mxu0 0.0
    %1873 = vmatpush2.msra.mxu0 %v1761
    %1874 = vmatprep.subr.mxu0 0.0
    %1875 = vmatpush2.msra.mxu0 %v1760
    %1876 = vmatprep.subr.mxu0 0.0
    %1877 = vmatpush2.msra.mxu0 %v1759
    %1878 = vmatprep.subr.mxu0 0.0
    %1879 = vmatpush2.msra.mxu0 %v1758
    %1880 = vmatprep.subr.mxu0 0.0
    %1881 = vmatpush2.msra.mxu0 %v1757
    %1882 = vmatprep.subr.mxu0 0.0
    %1883 = vmatpush2.msra.mxu0 %v1756
    %1884 = vmatprep.subr.mxu0 0.0
    %1885 = vmatpush2.msra.mxu0 %v1755
    %1886 = vmatprep.subr.mxu0 0.0
    %1887 = vmatpush2.msra.mxu0 %v1754
    %1888 = vmatprep.subr.mxu0 0.0
    %1889 = vmatpush2.msra.mxu0 %v1753
    %1890 = vmatprep.subr.mxu0 0.0
    %1891 = vmatpush2.msra.mxu0 %v1752
    %1892 = vmatprep.subr.mxu0 0.0
    %1893 = vmatpush2.msra.mxu0 %v1751
    %1894 = vmatprep.subr.mxu0 0.0
    %1895 = vmatpush2.msra.mxu0 %v1750
    %1896 = vmatprep.subr.mxu0 0.0
    %1897 = vmatpush2.msra.mxu0 %v1749
    %1898 = vmatprep.mubr.f32.mxu0 %v1727
    %1899 = vmatmul.mubr.f32.gmra.mxu0 %v1726
    %v1900 = vpop.f32.mrf.mxu0
    %v1901 = vadd.f32 0.0, %v1900
    %v1902 = vpop.f32.mrf.mxu0
    %1903 = vdwg.mxu0
    %1904 = vmatprep.subr.mxu0 0.0
    %1905 = vmatpush1.msra.mxu0 %v1780
    %1906 = vmatprep.subr.mxu0 0.0
    %1907 = vmatpush1.msra.mxu0 %v1779
    %1908 = vmatprep.subr.mxu0 0.0
    %1909 = vmatpush1.msra.mxu0 %v1778
    %1910 = vmatprep.subr.mxu0 0.0
    %1911 = vmatpush1.msra.mxu0 %v1777
    %1912 = vmatprep.subr.mxu0 0.0
    %1913 = vmatpush1.msra.mxu0 %v1776
    %1914 = vmatprep.subr.mxu0 0.0
    %1915 = vmatpush1.msra.mxu0 %v1775
    %1916 = vmatprep.subr.mxu0 0.0
    %1917 = vmatpush1.msra.mxu0 %v1774
    %1918 = vmatprep.subr.mxu0 0.0
    %1919 = vmatpush1.msra.mxu0 %v1773
    %1920 = vmatprep.subr.mxu0 0.0
    %1921 = vmatpush1.msra.mxu0 %v1772
    %1922 = vmatprep.subr.mxu0 0.0
    %1923 = vmatpush1.msra.mxu0 %v1771
    %1924 = vmatprep.subr.mxu0 0.0
    %1925 = vmatpush1.msra.mxu0 %v1770
    %1926 = vmatprep.subr.mxu0 0.0
    %1927 = vmatpush1.msra.mxu0 %v1769
    %1928 = vmatprep.subr.mxu0 0.0
    %1929 = vmatpush1.msra.mxu0 %v1768
    %1930 = vmatprep.subr.mxu0 0.0
    %1931 = vmatpush1.msra.mxu0 %v1767
    %1932 = vmatprep.subr.mxu0 0.0
    %1933 = vmatpush1.msra.mxu0 %v1766
    %1934 = vmatprep.subr.mxu0 0.0
    %1935 = vmatpush1.msra.mxu0 %v1765
    %1936 = vmatprep.subr.mxu0 0.0
    %1937 = vmatpush2.msra.mxu0 %v1796
    %1938 = vmatprep.subr.mxu0 0.0
    %1939 = vmatpush2.msra.mxu0 %v1795
    %1940 = vmatprep.subr.mxu0 0.0
    %1941 = vmatpush2.msra.mxu0 %v1794
    %1942 = vmatprep.subr.mxu0 0.0
    %1943 = vmatpush2.msra.mxu0 %v1793
    %1944 = vmatprep.subr.mxu0 0.0
    %1945 = vmatpush2.msra.mxu0 %v1792
    %1946 = vmatprep.subr.mxu0 0.0
    %1947 = vmatpush2.msra.mxu0 %v1791
    %1948 = vmatprep.subr.mxu0 0.0
    %1949 = vmatpush2.msra.mxu0 %v1790
    %1950 = vmatprep.subr.mxu0 0.0
    %1951 = vmatpush2.msra.mxu0 %v1789
    %1952 = vmatprep.subr.mxu0 0.0
    %1953 = vmatpush2.msra.mxu0 %v1788
    %1954 = vmatprep.subr.mxu0 0.0
    %1955 = vmatpush2.msra.mxu0 %v1787
    %1956 = vmatprep.subr.mxu0 0.0
    %1957 = vmatpush2.msra.mxu0 %v1786
    %1958 = vmatprep.subr.mxu0 0.0
    %1959 = vmatpush2.msra.mxu0 %v1785
    %1960 = vmatprep.subr.mxu0 0.0
    %1961 = vmatpush2.msra.mxu0 %v1784
    %1962 = vmatprep.subr.mxu0 0.0
    %1963 = vmatpush2.msra.mxu0 %v1783
    %1964 = vmatprep.subr.mxu0 0.0
    %1965 = vmatpush2.msra.mxu0 %v1782
    %1966 = vmatprep.subr.mxu0 0.0
    %1967 = vmatpush2.msra.mxu0 %v1781
    %1968 = vmatprep.mubr.f32.mxu0 %v1729
    %1969 = vmatmul.mubr.f32.gmra.mxu0 %v1728
    %v1970 = vpop.f32.mrf.mxu0
    %v1971 = vadd.f32 %v1901, %v1970
    %v1972 = vpop.f32.mrf.mxu0
    %1973 = vdwg.mxu0
    %1974 = vmatprep.subr.mxu0 0.0
    %1975 = vmatpush1.msra.mxu0 %v1812
    %1976 = vmatprep.subr.mxu0 0.0
    %1977 = vmatpush1.msra.mxu0 %v1811
    %1978 = vmatprep.subr.mxu0 0.0
    %1979 = vmatpush1.msra.mxu0 %v1810
    %1980 = vmatprep.subr.mxu0 0.0
    %1981 = vmatpush1.msra.mxu0 %v1809
    %1982 = vmatprep.subr.mxu0 0.0
    %1983 = vmatpush1.msra.mxu0 %v1808
    %1984 = vmatprep.subr.mxu0 0.0
    %1985 = vmatpush1.msra.mxu0 %v1807
    %1986 = vmatprep.subr.mxu0 0.0
    %1987 = vmatpush1.msra.mxu0 %v1806
    %1988 = vmatprep.subr.mxu0 0.0
    %1989 = vmatpush1.msra.mxu0 %v1805
    %1990 = vmatprep.subr.mxu0 0.0
    %1991 = vmatpush1.msra.mxu0 %v1804
    %1992 = vmatprep.subr.mxu0 0.0
    %1993 = vmatpush1.msra.mxu0 %v1803
    %1994 = vmatprep.subr.mxu0 0.0
    %1995 = vmatpush1.msra.mxu0 %v1802
    %1996 = vmatprep.subr.mxu0 0.0
    %1997 = vmatpush1.msra.mxu0 %v1801
    %1998 = vmatprep.subr.mxu0 0.0
    %1999 = vmatpush1.msra.mxu0 %v1800
    %2000 = vmatprep.subr.mxu0 0.0
    %2001 = vmatpush1.msra.mxu0 %v1799
    %2002 = vmatprep.subr.mxu0 0.0
    %2003 = vmatpush1.msra.mxu0 %v1798
    %2004 = vmatprep.subr.mxu0 0.0
    %2005 = vmatpush1.msra.mxu0 %v1797
    %2006 = vmatprep.subr.mxu0 0.0
    %2007 = vmatpush2.msra.mxu0 %v1828
    %2008 = vmatprep.subr.mxu0 0.0
    %2009 = vmatpush2.msra.mxu0 %v1827
    %2010 = vmatprep.subr.mxu0 0.0
    %2011 = vmatpush2.msra.mxu0 %v1826
    %2012 = vmatprep.subr.mxu0 0.0
    %2013 = vmatpush2.msra.mxu0 %v1825
    %2014 = vmatprep.subr.mxu0 0.0
    %2015 = vmatpush2.msra.mxu0 %v1824
    %2016 = vmatprep.subr.mxu0 0.0
    %2017 = vmatpush2.msra.mxu0 %v1823
    %2018 = vmatprep.subr.mxu0 0.0
    %2019 = vmatpush2.msra.mxu0 %v1822
    %2020 = vmatprep.subr.mxu0 0.0
    %2021 = vmatpush2.msra.mxu0 %v1821
    %2022 = vmatprep.subr.mxu0 0.0
    %2023 = vmatpush2.msra.mxu0 %v1820
    %2024 = vmatprep.subr.mxu0 0.0
    %2025 = vmatpush2.msra.mxu0 %v1819
    %2026 = vmatprep.subr.mxu0 0.0
    %2027 = vmatpush2.msra.mxu0 %v1818
    %2028 = vmatprep.subr.mxu0 0.0
    %2029 = vmatpush2.msra.mxu0 %v1817
    %2030 = vmatprep.subr.mxu0 0.0
    %2031 = vmatpush2.msra.mxu0 %v1816
    %2032 = vmatprep.subr.mxu0 0.0
    %2033 = vmatpush2.msra.mxu0 %v1815
    %2034 = vmatprep.subr.mxu0 0.0
    %2035 = vmatpush2.msra.mxu0 %v1814
    %2036 = vmatprep.subr.mxu0 0.0
    %2037 = vmatpush2.msra.mxu0 %v1813
    %2038 = vmatprep.mubr.f32.mxu0 %v1731
    %2039 = vmatmul.mubr.f32.gmra.mxu0 %v1730
    %v2040 = vpop.f32.mrf.mxu0
    %v2041 = vadd.f32 %v1971, %v2040
    %v2042 = vpop.f32.mrf.mxu0
    %2043 = vdwg.mxu0
    %2044 = vmatprep.subr.mxu0 0.0
    %2045 = vmatpush1.msra.mxu0 0.0
    %2046 = vmatprep.subr.mxu0 0.0
    %2047 = vmatpush1.msra.mxu0 0.0
    %2048 = vmatprep.subr.mxu0 0.0
    %2049 = vmatpush1.msra.mxu0 0.0
    %2050 = vmatprep.subr.mxu0 0.0
    %2051 = vmatpush1.msra.mxu0 0.0
    %2052 = vmatprep.subr.mxu0 0.0
    %2053 = vmatpush1.msra.mxu0 0.0
    %2054 = vmatprep.subr.mxu0 0.0
    %2055 = vmatpush1.msra.mxu0 0.0
    %2056 = vmatprep.subr.mxu0 0.0
    %2057 = vmatpush1.msra.mxu0 0.0
    %2058 = vmatprep.subr.mxu0 0.0
    %2059 = vmatpush1.msra.mxu0 0.0
    %2060 = vmatprep.subr.mxu0 0.0
    %2061 = vmatpush1.msra.mxu0 0.0
    %2062 = vmatprep.subr.mxu0 0.0
    %2063 = vmatpush1.msra.mxu0 0.0
    %2064 = vmatprep.subr.mxu0 0.0
    %2065 = vmatpush1.msra.mxu0 0.0
    %2066 = vmatprep.subr.mxu0 0.0
    %2067 = vmatpush1.msra.mxu0 0.0
    %2068 = vmatprep.subr.mxu0 0.0
    %2069 = vmatpush1.msra.mxu0 0.0
    %2070 = vmatprep.subr.mxu0 0.0
    %2071 = vmatpush1.msra.mxu0 0.0
    %2072 = vmatprep.subr.mxu0 0.0
    %2073 = vmatpush1.msra.mxu0 %v1830
    %2074 = vmatprep.subr.mxu0 0.0
    %2075 = vmatpush1.msra.mxu0 %v1829
    %2076 = vmatprep.subr.mxu0 0.0
    %2077 = vmatpush2.msra.mxu0 0.0
    %2078 = vmatprep.subr.mxu0 0.0
    %2079 = vmatpush2.msra.mxu0 0.0
    %2080 = vmatprep.subr.mxu0 0.0
    %2081 = vmatpush2.msra.mxu0 0.0
    %2082 = vmatprep.subr.mxu0 0.0
    %2083 = vmatpush2.msra.mxu0 0.0
    %2084 = vmatprep.subr.mxu0 0.0
    %2085 = vmatpush2.msra.mxu0 0.0
    %2086 = vmatprep.subr.mxu0 0.0
    %2087 = vmatpush2.msra.mxu0 0.0
    %2088 = vmatprep.subr.mxu0 0.0
    %2089 = vmatpush2.msra.mxu0 0.0
    %2090 = vmatprep.subr.mxu0 0.0
    %2091 = vmatpush2.msra.mxu0 0.0
    %2092 = vmatprep.subr.mxu0 0.0
    %2093 = vmatpush2.msra.mxu0 0.0
    %2094 = vmatprep.subr.mxu0 0.0
    %2095 = vmatpush2.msra.mxu0 0.0
    %2096 = vmatprep.subr.mxu0 0.0
    %2097 = vmatpush2.msra.mxu0 0.0
    %2098 = vmatprep.subr.mxu0 0.0
    %2099 = vmatpush2.msra.mxu0 0.0
    %2100 = vmatprep.subr.mxu0 0.0
    %2101 = vmatpush2.msra.mxu0 0.0
    %2102 = vmatprep.subr.mxu0 0.0
    %2103 = vmatpush2.msra.mxu0 0.0
    %2104 = vmatprep.subr.mxu0 0.0
    %2105 = vmatpush2.msra.mxu0 0.0
    %2106 = vmatprep.subr.mxu0 0.0
    %2107 = vmatpush2.msra.mxu0 0.0
    %2108 = vmatprep.mubr.f32.mxu0 0.0
    %2109 = vmatmul.mubr.f32.gmra.mxu0 %v1832
    %v2110 = vpop.f32.mrf.mxu0
    %v2111 = vadd.f32 %v2041, %v2110
    %v2112 = vpop.f32.mrf.mxu0
    %2113 = vdwg.mxu0
    %v2115 = vrot.slane %v2111, 2
    %v2117 = vmax.f32 %v2111, %v2115
    %v2119 = vrot.slane %v2117, 4
    %v2121 = vmax.f32 %v2117, %v2119
    %v2122 = vld [vmem:[%s4 + $0x1] sm:$0x1]
    %v2123 = vlaneseq
    %v2124 = vshrl.u32 %v2123, 7
    %v2125 = vsub.s32 0, %v2124
    %v2126 = vrot.slane %v2122, %v2125
    %v2127 = vadd.f32 %v2121, %v2126
    %v2128 = vmax.f32 %v2127, 0.0
    %v2129 = vld [vmem:[%s3] sm:$0xff]
    %v2130 = vld [vmem:[%s3 + $0x8] sm:$0xff]
    %v2131 = vld [vmem:[%s3 + $0x10] sm:$0xff]
    %v2132 = vld [vmem:[%s3 + $0x18] sm:$0xff]
    %v2133 = vld [vmem:[%s4 + $0x2] sm:$0x1]
    %v2134 = vlaneseq
    %v2135 = vshrl.u32 %v2134, 7
    %v2136 = vsub.s32 0, %v2135
    %v2137 = vrot.slane %v2133, %v2136
    %v2139 = vsel %vm982, %v2128, 0
    %2141 = vmatprep.subr.mxu0 0.0
    %2142 = vmatpush1.msra.mxu0 0.0
    %2143 = vmatprep.subr.mxu0 0.0
    %2144 = vmatpush1.msra.mxu0 0.0
    %2145 = vmatprep.subr.mxu0 0.0
    %2146 = vmatpush1.msra.mxu0 0.0
    %2147 = vmatprep.subr.mxu0 0.0
    %2148 = vmatpush1.msra.mxu0 0.0
    %2149 = vmatprep.subr.mxu0 0.0
    %2150 = vmatpush1.msra.mxu0 0.0
    %2151 = vmatprep.subr.mxu0 0.0
    %2152 = vmatpush1.msra.mxu0 0.0
    %2153 = vmatprep.subr.mxu0 0.0
    %2154 = vmatpush1.msra.mxu0 0.0
    %2155 = vmatprep.subr.mxu0 0.0
    %2156 = vmatpush1.msra.mxu0 0.0
    %2157 = vmatprep.subr.mxu0 0.0
    %2158 = vmatpush1.msra.mxu0 0.0
    %2159 = vmatprep.subr.mxu0 0.0
    %2160 = vmatpush1.msra.mxu0 0.0
    %2161 = vmatprep.subr.mxu0 0.0
    %2162 = vmatpush1.msra.mxu0 0.0
    %2163 = vmatprep.subr.mxu0 0.0
    %2164 = vmatpush1.msra.mxu0 0.0
    %2165 = vmatprep.subr.mxu0 0.0
    %2166 = vmatpush1.msra.mxu0 %v2132
    %2167 = vmatprep.subr.mxu0 0.0
    %2168 = vmatpush1.msra.mxu0 %v2131
    %2169 = vmatprep.subr.mxu0 0.0
    %2170 = vmatpush1.msra.mxu0 %v2130
    %2171 = vmatprep.subr.mxu0 0.0
    %2172 = vmatpush1.msra.mxu0 %v2129
    %2173 = vmatprep.subr.mxu0 0.0
    %2174 = vmatpush2.msra.mxu0 0.0
    %2175 = vmatprep.subr.mxu0 0.0
    %2176 = vmatpush2.msra.mxu0 0.0
    %2177 = vmatprep.subr.mxu0 0.0
    %2178 = vmatpush2.msra.mxu0 0.0
    %2179 = vmatprep.subr.mxu0 0.0
    %2180 = vmatpush2.msra.mxu0 0.0
    %2181 = vmatprep.subr.mxu0 0.0
    %2182 = vmatpush2.msra.mxu0 0.0
    %2183 = vmatprep.subr.mxu0 0.0
    %2184 = vmatpush2.msra.mxu0 0.0
    %2185 = vmatprep.subr.mxu0 0.0
    %2186 = vmatpush2.msra.mxu0 0.0
    %2187 = vmatprep.subr.mxu0 0.0
    %2188 = vmatpush2.msra.mxu0 0.0
    %2189 = vmatprep.subr.mxu0 0.0
    %2190 = vmatpush2.msra.mxu0 0.0
    %2191 = vmatprep.subr.mxu0 0.0
    %2192 = vmatpush2.msra.mxu0 0.0
    %2193 = vmatprep.subr.mxu0 0.0
    %2194 = vmatpush2.msra.mxu0 0.0
    %2195 = vmatprep.subr.mxu0 0.0
    %2196 = vmatpush2.msra.mxu0 0.0
    %2197 = vmatprep.subr.mxu0 0.0
    %2198 = vmatpush2.msra.mxu0 0.0
    %2199 = vmatprep.subr.mxu0 0.0
    %2200 = vmatpush2.msra.mxu0 0.0
    %2201 = vmatprep.subr.mxu0 0.0
    %2202 = vmatpush2.msra.mxu0 0.0
    %2203 = vmatprep.subr.mxu0 0.0
    %2204 = vmatpush2.msra.mxu0 0.0
    %2205 = vmatprep.mubr.f32.mxu0 0.0
    %2206 = vmatmul.mubr.f32.gmra.mxu0 %v2139
    %v2207 = vpop.f32.mrf.mxu0
    %v2208 = vadd.f32 %v2137, %v2207
    %v2209 = vpop.f32.mrf.mxu0
    %2210 = vdwg.mxu0
    %v2211 = vmax.f32 %v2208, 0.0
    %v2212 = vld [vmem:[%s3 + $0x20] sm:$0xff]
    %v2213 = vld [vmem:[%s3 + $0x28] sm:$0xff]
    %v2214 = vld [vmem:[%s3 + $0x30] sm:$0xff]
    %v2215 = vld [vmem:[%s3 + $0x38] sm:$0xff]
    %v2216 = vld [vmem:[%s3 + $0x40] sm:$0xff]
    %v2217 = vld [vmem:[%s3 + $0x48] sm:$0xff]
    %v2218 = vld [vmem:[%s3 + $0x50] sm:$0xff]
    %v2219 = vld [vmem:[%s3 + $0x58] sm:$0xff]
    %v2220 = vld [vmem:[%s3 + $0x60] sm:$0xff]
    %v2221 = vld [vmem:[%s3 + $0x68] sm:$0xff]
    %v2222 = vld [vmem:[%s3 + $0x70] sm:$0xff]
    %v2223 = vld [vmem:[%s3 + $0x78] sm:$0xff]
    %v2224 = vld [vmem:[%s3 + $0x80] sm:$0xff]
    %v2225 = vld [vmem:[%s3 + $0x88] sm:$0xff]
    %v2226 = vld [vmem:[%s3 + $0x90] sm:$0xff]
    %v2227 = vld [vmem:[%s4 + $0x3] sm:$0x1]
    %v2228 = vlaneseq
    %v2229 = vshrl.u32 %v2228, 7
    %v2230 = vsub.s32 0, %v2229
    %v2231 = vrot.slane %v2227, %v2230
    %vm2232 = vcmask 982016
    %v2234 = vsel %vm2232, %v2211, 0
    %2236 = vmatprep.subr.mxu0 0.0
    %2237 = vmatpush1.msra.mxu0 0.0
    %2238 = vmatprep.subr.mxu0 0.0
    %2239 = vmatpush1.msra.mxu0 %v2226
    %2240 = vmatprep.subr.mxu0 0.0
    %2241 = vmatpush1.msra.mxu0 %v2225
    %2242 = vmatprep.subr.mxu0 0.0
    %2243 = vmatpush1.msra.mxu0 %v2224
    %2244 = vmatprep.subr.mxu0 0.0
    %2245 = vmatpush1.msra.mxu0 %v2223
    %2246 = vmatprep.subr.mxu0 0.0
    %2247 = vmatpush1.msra.mxu0 %v2222
    %2248 = vmatprep.subr.mxu0 0.0
    %2249 = vmatpush1.msra.mxu0 %v2221
    %2250 = vmatprep.subr.mxu0 0.0
    %2251 = vmatpush1.msra.mxu0 %v2220
    %2252 = vmatprep.subr.mxu0 0.0
    %2253 = vmatpush1.msra.mxu0 %v2219
    %2254 = vmatprep.subr.mxu0 0.0
    %2255 = vmatpush1.msra.mxu0 %v2218
    %2256 = vmatprep.subr.mxu0 0.0
    %2257 = vmatpush1.msra.mxu0 %v2217
    %2258 = vmatprep.subr.mxu0 0.0
    %2259 = vmatpush1.msra.mxu0 %v2216
    %2260 = vmatprep.subr.mxu0 0.0
    %2261 = vmatpush1.msra.mxu0 %v2215
    %2262 = vmatprep.subr.mxu0 0.0
    %2263 = vmatpush1.msra.mxu0 %v2214
    %2264 = vmatprep.subr.mxu0 0.0
    %2265 = vmatpush1.msra.mxu0 %v2213
    %2266 = vmatprep.subr.mxu0 0.0
    %2267 = vmatpush1.msra.mxu0 %v2212
    %2268 = vmatprep.subr.mxu0 0.0
    %2269 = vmatpush2.msra.mxu0 0.0
    %2270 = vmatprep.subr.mxu0 0.0
    %2271 = vmatpush2.msra.mxu0 0.0
    %2272 = vmatprep.subr.mxu0 0.0
    %2273 = vmatpush2.msra.mxu0 0.0
    %2274 = vmatprep.subr.mxu0 0.0
    %2275 = vmatpush2.msra.mxu0 0.0
    %2276 = vmatprep.subr.mxu0 0.0
    %2277 = vmatpush2.msra.mxu0 0.0
    %2278 = vmatprep.subr.mxu0 0.0
    %2279 = vmatpush2.msra.mxu0 0.0
    %2280 = vmatprep.subr.mxu0 0.0
    %2281 = vmatpush2.msra.mxu0 0.0
    %2282 = vmatprep.subr.mxu0 0.0
    %2283 = vmatpush2.msra.mxu0 0.0
    %2284 = vmatprep.subr.mxu0 0.0
    %2285 = vmatpush2.msra.mxu0 0.0
    %2286 = vmatprep.subr.mxu0 0.0
    %2287 = vmatpush2.msra.mxu0 0.0
    %2288 = vmatprep.subr.mxu0 0.0
    %2289 = vmatpush2.msra.mxu0 0.0
    %2290 = vmatprep.subr.mxu0 0.0
    %2291 = vmatpush2.msra.mxu0 0.0
    %2292 = vmatprep.subr.mxu0 0.0
    %2293 = vmatpush2.msra.mxu0 0.0
    %2294 = vmatprep.subr.mxu0 0.0
    %2295 = vmatpush2.msra.mxu0 0.0
    %2296 = vmatprep.subr.mxu0 0.0
    %2297 = vmatpush2.msra.mxu0 0.0
    %2298 = vmatprep.subr.mxu0 0.0
    %2299 = vmatpush2.msra.mxu0 0.0
    %2300 = vmatprep.mubr.f32.mxu0 0.0
    %2301 = vmatmul.mubr.f32.gmra.mxu0 %v2234
    %v2302 = vpop.f32.mrf.mxu0
    %v2303 = vadd.f32 %v2231, %v2302
    %v2304 = vpop.f32.mrf.mxu0
    %2305 = vdwg.mxu0
    %v2306 = vmax.f32 %v2303, 0.0
    %v2307 = vld [vmem:[%s3 + $0x98] sm:$0xff]
    %v2308 = vld [vmem:[%s3 + $0xa0] sm:$0xff]
    %v2309 = vld [vmem:[%s3 + $0xa8] sm:$0xff]
    %v2310 = vld [vmem:[%s3 + $0xb0] sm:$0xff]
    %v2311 = vld [vmem:[%s3 + $0xb8] sm:$0xff]
    %v2312 = vld [vmem:[%s3 + $0xc0] sm:$0xff]
    %v2313 = vld [vmem:[%s3 + $0xc8] sm:$0xff]
    %v2314 = vld [vmem:[%s3 + $0xd0] sm:$0xff]
    %v2315 = vld [vmem:[%s3 + $0xd8] sm:$0xff]
    %v2316 = vld [vmem:[%s3 + $0xe0] sm:$0xff]
    %v2317 = vld [vmem:[%s3 + $0xe8] sm:$0xf]
    %v2318 = vld [vmem:[%s4 + $0x4] sm:$0x1]
    %v2319 = vlaneseq
    %v2320 = vshrl.u32 %v2319, 7
    %v2321 = vsub.s32 0, %v2320
    %v2322 = vrot.slane %v2318, %v2321
    %vm2323 = vcmask 687104
    %v2325 = vsel %vm2323, %v2306, 0
    %v2328 = vsel %vm1717, %v2317, 0
    %2330 = vmatprep.subr.mxu0 0.0
    %2331 = vmatpush1.msra.mxu0 0.0
    %2332 = vmatprep.subr.mxu0 0.0
    %2333 = vmatpush1.msra.mxu0 0.0
    %2334 = vmatprep.subr.mxu0 0.0
    %2335 = vmatpush1.msra.mxu0 0.0
    %2336 = vmatprep.subr.mxu0 0.0
    %2337 = vmatpush1.msra.mxu0 0.0
    %2338 = vmatprep.subr.mxu0 0.0
    %2339 = vmatpush1.msra.mxu0 0.0
    %2340 = vmatprep.subr.mxu0 0.0
    %2341 = vmatpush1.msra.mxu0 %v2328
    %2342 = vmatprep.subr.mxu0 0.0
    %2343 = vmatpush1.msra.mxu0 %v2316
    %2344 = vmatprep.subr.mxu0 0.0
    %2345 = vmatpush1.msra.mxu0 %v2315
    %2346 = vmatprep.subr.mxu0 0.0
    %2347 = vmatpush1.msra.mxu0 %v2314
    %2348 = vmatprep.subr.mxu0 0.0
    %2349 = vmatpush1.msra.mxu0 %v2313
    %2350 = vmatprep.subr.mxu0 0.0
    %2351 = vmatpush1.msra.mxu0 %v2312
    %2352 = vmatprep.subr.mxu0 0.0
    %2353 = vmatpush1.msra.mxu0 %v2311
    %2354 = vmatprep.subr.mxu0 0.0
    %2355 = vmatpush1.msra.mxu0 %v2310
    %2356 = vmatprep.subr.mxu0 0.0
    %2357 = vmatpush1.msra.mxu0 %v2309
    %2358 = vmatprep.subr.mxu0 0.0
    %2359 = vmatpush1.msra.mxu0 %v2308
    %2360 = vmatprep.subr.mxu0 0.0
    %2361 = vmatpush1.msra.mxu0 %v2307
    %2362 = vmatprep.subr.mxu0 0.0
    %2363 = vmatpush2.msra.mxu0 0.0
    %2364 = vmatprep.subr.mxu0 0.0
    %2365 = vmatpush2.msra.mxu0 0.0
    %2366 = vmatprep.subr.mxu0 0.0
    %2367 = vmatpush2.msra.mxu0 0.0
    %2368 = vmatprep.subr.mxu0 0.0
    %2369 = vmatpush2.msra.mxu0 0.0
    %2370 = vmatprep.subr.mxu0 0.0
    %2371 = vmatpush2.msra.mxu0 0.0
    %2372 = vmatprep.subr.mxu0 0.0
    %2373 = vmatpush2.msra.mxu0 0.0
    %2374 = vmatprep.subr.mxu0 0.0
    %2375 = vmatpush2.msra.mxu0 0.0
    %2376 = vmatprep.subr.mxu0 0.0
    %2377 = vmatpush2.msra.mxu0 0.0
    %2378 = vmatprep.subr.mxu0 0.0
    %2379 = vmatpush2.msra.mxu0 0.0
    %2380 = vmatprep.subr.mxu0 0.0
    %2381 = vmatpush2.msra.mxu0 0.0
    %2382 = vmatprep.subr.mxu0 0.0
    %2383 = vmatpush2.msra.mxu0 0.0
    %2384 = vmatprep.subr.mxu0 0.0
    %2385 = vmatpush2.msra.mxu0 0.0
    %2386 = vmatprep.subr.mxu0 0.0
    %2387 = vmatpush2.msra.mxu0 0.0
    %2388 = vmatprep.subr.mxu0 0.0
    %2389 = vmatpush2.msra.mxu0 0.0
    %2390 = vmatprep.subr.mxu0 0.0
    %2391 = vmatpush2.msra.mxu0 0.0
    %2392 = vmatprep.subr.mxu0 0.0
    %2393 = vmatpush2.msra.mxu0 0.0
    %2394 = vmatprep.mubr.f32.mxu0 0.0
    %2395 = vmatmul.mubr.f32.gmra.mxu0 %v2325
    %v2396 = vpop.f32.mrf.mxu0
    %v2397 = vadd.f32 %v2322, %v2396
    %v2398 = vpop.f32.mrf.mxu0
    %2399 = vdwg.mxu0
    %vm2400 = vcmask 74752
    %2401 = vst.msk [vmem:[#allocation2] sm:$0x3] %vm2400, %v2397
    // Predicated region
    $region22: #{net_forward.1} parent=1 // pred_check
      _
    $region23: #{net_forward.1} parent=1 // pred_check_branch
      %2403 = sbr.rel (0) target = $region25
    $region24: #{net_forward.1} parent=1 // pred_region
      %s2405 = ssub.s32 32, 32
      %2406 = vsyncadd [#allocation3], %s2405
      %s2408 = sshll.u32 [#allocation2], 4
      %s2409 = int_to_ptr.vmem [resolvable:$true] %s2408
      %2411 = dma.vmem_to_hbm [thread:$0]  %s2409, 32, %s5, [#allocation3]
    $region25: #{net_forward.1} parent=1 // pred_fallthru
      _
    // Predicated region
    $region26: #{net_forward.1} parent=1 // pred_check
      _
    $region27: #{net_forward.1} parent=1 // pred_check_branch
      %2413 = sbr.rel (0) target = $region29
    $region28: #{net_forward.1} parent=1 // pred_region
      %2414 = dma.done [#allocation3], 32
    $region29: #{net_forward.1} parent=1 // pred_fallthru
      _
    %2415 = vsyncpa [#allocation3], 1

</llo_original>
